<compile_context>
chip_gen: v7x
topology: tpu7x:2x2x1
jax: 0.10.0
libtpu: 0.0.40
codegen_flags: <defaults>
</compile_context>

<pallas_src>
import jax
import jax.numpy as jnp
from jax import lax
from jax.experimental import pallas as pl
from jax.experimental.pallas import tpu as pltpu


def make_res_attention_kernel(H, W, C, K, P, res_scale):
    """Build the per-image kernel body (all sizes static)."""
    WC = W * C

    def conv_as_matmul(v, w_ref, b_ref):
        # v: (H, WC) f32.  Patch lane-block kh holds rows shifted by (kh - P), zero filled.
        zrows = jnp.zeros((P, WC), jnp.float32)
        vp = jnp.concatenate([zrows, v, zrows], axis=0)               # (H + 2P, WC)
        patch = jnp.concatenate([vp[kh:kh + H, :] for kh in range(K)], axis=-1)
        patch = patch.astype(jnp.bfloat16)                            # (H, K*WC)
        acc = jnp.dot(patch, w_ref[...], preferred_element_type=jnp.float32)
        return acc + b_ref[...]                                       # (H, WC) f32

    def kernel(x_ref, w1_ref, b1_ref, w2_ref, b2_ref,
               wd1_ref, bd1_ref, wd2_ref, bd2_ref, out_ref):
        x = x_ref[...].astype(jnp.float32)                            # (H, WC), lane dense

        # conv1 -> ReLU, conv2 : one MXU matmul each
        h1 = jnp.maximum(conv_as_matmul(x, w1_ref, b1_ref), 0.0)
        res = conv_as_matmul(h1, w2_ref, b2_ref)

        # CALayer: global avg-pool -> 1x1 -> ReLU -> 1x1 -> sigmoid (weights pre-tiled)
        colmean = jnp.mean(res, axis=0, keepdims=True)                # (1, WC), 1/H folded
        z = jnp.dot(colmean, wd1_ref[...],
                    preferred_element_type=jnp.float32) + bd1_ref[...]
        z = jnp.maximum(z, 0.0)                                       # (1, Cr)
        s = jnp.dot(z, wd2_ref[...],
                    preferred_element_type=jnp.float32) + bd2_ref[...]
        s = jax.nn.sigmoid(s)                                         # (1, WC) per-channel scale

        # residual: res_scale * (res * s) + x   (re-read x from the ref; exact f32 path)
        out = res * s * res_scale + x_ref[...].astype(jnp.float32)
        out_ref[...] = out.astype(out_ref.dtype)

    return kernel


def _expand_conv_weight(w_oihw, W, K, P, dtype):
    """(Cout, Cin, K, K) -> block-Toeplitz (K*W*Cin, W*Cout) matching the kernel patch layout.

    row index = kh*W*Cin + wi*Cin + ci ; col index = wo*Cout + co
    entry     = w[co, ci, kh, kw] with wi = wo + kw - P   (0 if wi outside [0, W): W-padding)
    """
    Cout, Cin = w_oihw.shape[0], w_oihw.shape[1]
    Wt = jnp.transpose(w_oihw, (2, 3, 1, 0)).astype(jnp.float32)      # (K, K, Cin, Cout)
    kw = jnp.arange(K)[:, None, None]
    wi = jnp.arange(W)[None, :, None]
    wo = jnp.arange(W)[None, None, :]
    ind = (wi == wo + kw - P).astype(jnp.float32)                     # (K, W, W) [kw, wi, wo]
    big = jnp.einsum('kio,hkcd->hicod', ind, Wt)                      # (K, W, Cin, W, Cout)
    return big.reshape(K * W * Cin, W * Cout).astype(dtype)


def res_attention_block(x_nchw, params, *, kernel_size=3, res_scale=1.0):
    """Pallas implementation of ResAttentionBlock.forward. x_nchw: (B, C, H, W)."""
    w1, b1, w2, b2, wd1, bd1, wd2, bd2 = params
    B, C, H, W = x_nchw.shape
    K = kernel_size
    P = K // 2
    WC = W * C
    Cr = wd1.shape[1]

    # Fold channels into the lane dim: (B, C, H, W) -> NHWC -> (B, H, W*C)  (free reshape).
    x2d = jnp.transpose(x_nchw, (0, 2, 3, 1)).reshape(B, H, WC)

    # Conv weights -> single-matmul (bf16) form; biases / CA weights pre-tiled lane-dense.
    w1_big = _expand_conv_weight(w1, W, K, P, jnp.bfloat16)           # (K*WC, WC)
    w2_big = _expand_conv_weight(w2, W, K, P, jnp.bfloat16)
    b1_big = jnp.tile(b1.reshape(1, C), (1, W)).astype(jnp.float32)   # (1, WC)
    b2_big = jnp.tile(b2.reshape(1, C), (1, W)).astype(jnp.float32)
    wd1_big = (jnp.tile(wd1, (W, 1)) / W).astype(jnp.float32)         # (WC, Cr), absorbs 1/W
    bd1_r = bd1.reshape(1, Cr).astype(jnp.float32)                    # (1, Cr)
    wd2_big = jnp.tile(wd2, (1, W)).astype(jnp.float32)               # (Cr, WC)
    bd2_big = jnp.tile(bd2.reshape(1, C), (1, W)).astype(jnp.float32)  # (1, WC)

    kernel = make_res_attention_kernel(H, W, C, K, P, res_scale)

    def const_spec(a):
        n = a.ndim
        return pl.BlockSpec(a.shape, lambda b, n=n: (0,) * n)

    out2d = pl.pallas_call(
        kernel,
        out_shape=jax.ShapeDtypeStruct((B, H, WC), x_nchw.dtype),
        grid_spec=pltpu.PrefetchScalarGridSpec(
            num_scalar_prefetch=0,
            grid=(B,),
            in_specs=[
                pl.BlockSpec((pl.Squeezed(), H, WC), lambda b: (b, 0, 0)),
                const_spec(w1_big), const_spec(b1_big),
                const_spec(w2_big), const_spec(b2_big),
                const_spec(wd1_big), const_spec(bd1_r),
                const_spec(wd2_big), const_spec(bd2_big),
            ],
            out_specs=pl.BlockSpec((pl.Squeezed(), H, WC), lambda b: (b, 0, 0)),
        ),
        compiler_params=pltpu.CompilerParams(
            dimension_semantics=("parallel",)),
    )(x2d, w1_big, b1_big, w2_big, b2_big, wd1_big, bd1_r, wd2_big, bd2_big)

    # (B, H, W*C) -> (B, C, H, W)
    return jnp.transpose(out2d.reshape(B, H, W, C), (0, 3, 1, 2))


def ref_forward(x, w1, b1, w2, b2, wd1, bd1, wd2, bd2, *, K, res_scale):
    """Pure-JAX (XLA) reference mirroring the PyTorch module exactly (f32 convs)."""
    P = K // 2

    def conv(inp, w_oihw, bias):
        y = lax.conv_general_dilated(
            inp, w_oihw, window_strides=(1, 1),
            padding=[(P, P), (P, P)],
            dimension_numbers=('NCHW', 'OIHW', 'NCHW'),
            precision=lax.Precision.HIGHEST)
        return y + bias.reshape(1, -1, 1, 1)

    h1 = jnp.maximum(conv(x, w1, b1), 0.0)
    res = conv(h1, w2, b2)

    pooled = jnp.mean(res, axis=(2, 3))                               # (B, C)
    z = jnp.maximum(pooled @ wd1 + bd1, 0.0)                          # (B, C//r)
    s = jax.nn.sigmoid(z @ wd2 + bd2)                                 # (B, C)
    return res * s[:, :, None, None] * res_scale + x


if __name__ == "__main__":
    B, C, H, W = 2, 16, 16, 16
    K = 3
    reduction = 4
    Cr = C // reduction
    res_scale = 1.0

    key = jax.random.PRNGKey(0)
    ks = jax.random.split(key, 9)
    x = jax.random.normal(ks[0], (B, C, H, W), jnp.float32)

    # Synthetic parameters in PyTorch layouts:
    #   conv weights (Cout, Cin, K, K), conv biases (C,)
    #   CA 1x1 convs as matrices: wd1 (C, C//r), wd2 (C//r, C), biases (C//r,) / (C,)
    w1 = jax.random.normal(ks[1], (C, C, K, K), jnp.float32) * 0.08
    b1 = jax.random.normal(ks[2], (C,), jnp.float32) * 0.05
    w2 = jax.random.normal(ks[3], (C, C, K, K), jnp.float32) * 0.08
    b2 = jax.random.normal(ks[4], (C,), jnp.float32) * 0.05
    wd1 = jax.random.normal(ks[5], (C, Cr), jnp.float32) * 0.3
    bd1 = jax.random.normal(ks[6], (Cr,), jnp.float32) * 0.05
    wd2 = jax.random.normal(ks[7], (Cr, C), jnp.float32) * 0.3
    bd2 = jax.random.normal(ks[8], (C,), jnp.float32) * 0.05

    params = (w1, b1, w2, b2, wd1, bd1, wd2, bd2)

    out = res_attention_block(x, params, kernel_size=K, res_scale=res_scale)
    out = jax.block_until_ready(out)

    ref = ref_forward(x, *params, K=K, res_scale=res_scale)
    err = float(jnp.max(jnp.abs(out - ref)))
    assert out.shape == (B, C, H, W), out.shape
    # bf16 matmul operands (f32 accumulate) -> slightly looser tolerance than pure f32.
    assert err < 5e-2, f"max abs error too large: {err}"

    print("KERNEL_OK")
</pallas_src>

<mosaic_0001>
module attributes {stable_mosaic.version = 11 : i64} {
  func.func @kernel(%arg0: i32, %arg1: memref<1x16x256xf32, #tpu.memory_space<vmem>>, %arg2: memref<768x256xbf16, #tpu.memory_space<vmem>>, %arg3: memref<1x256xf32, #tpu.memory_space<vmem>>, %arg4: memref<768x256xbf16, #tpu.memory_space<vmem>>, %arg5: memref<1x256xf32, #tpu.memory_space<vmem>>, %arg6: memref<256x4xf32, #tpu.memory_space<vmem>>, %arg7: memref<1x4xf32, #tpu.memory_space<vmem>>, %arg8: memref<4x256xf32, #tpu.memory_space<vmem>>, %arg9: memref<1x256xf32, #tpu.memory_space<vmem>>, %arg10: memref<1x16x256xf32, #tpu.memory_space<vmem>>) attributes {dimension_semantics = [#tpu.dimension_semantics<parallel>], iteration_bounds = array<i64: 2>, scalar_prefetch = 0 : i64, scratch_operands = 0 : i64, tpu.core_type = #tpu.core_type<tc>, window_params = [{transform_indices = @transform_0, window_bounds = array<i64: 1, 16, 256>}, {pipeline_mode = #tpu.pipeline_mode<synchronous>, transform_indices = @transform_1, window_bounds = array<i64: 768, 256>}, {pipeline_mode = #tpu.pipeline_mode<synchronous>, transform_indices = @transform_2, window_bounds = array<i64: 1, 256>}, {pipeline_mode = #tpu.pipeline_mode<synchronous>, transform_indices = @transform_3, window_bounds = array<i64: 768, 256>}, {pipeline_mode = #tpu.pipeline_mode<synchronous>, transform_indices = @transform_4, window_bounds = array<i64: 1, 256>}, {pipeline_mode = #tpu.pipeline_mode<synchronous>, transform_indices = @transform_5, window_bounds = array<i64: 256, 4>}, {pipeline_mode = #tpu.pipeline_mode<synchronous>, transform_indices = @transform_6, window_bounds = array<i64: 1, 4>}, {pipeline_mode = #tpu.pipeline_mode<synchronous>, transform_indices = @transform_7, window_bounds = array<i64: 4, 256>}, {pipeline_mode = #tpu.pipeline_mode<synchronous>, transform_indices = @transform_8, window_bounds = array<i64: 1, 256>}, {transform_indices = @transform_9, window_bounds = array<i64: 1, 16, 256>}]} {
    %c0 = arith.constant 0 : index
    %c0_0 = arith.constant 0 : index
    %c0_1 = arith.constant 0 : index
    %0 = vector.load %arg1[%c0, %c0_0, %c0_1] : memref<1x16x256xf32, #tpu.memory_space<vmem>>, vector<1x16x256xf32>
    %1 = vector.shape_cast %0 : vector<1x16x256xf32> to vector<16x256xf32>
    %cst = arith.constant 0.000000e+00 : f32
    %2 = vector.broadcast %cst : f32 to vector<1x256xf32>
    %3 = tpu.concatenate %2, %1, %2 in 0 : vector<1x256xf32>, vector<16x256xf32>, vector<1x256xf32> -> vector<18x256xf32>
    %4 = vector.extract_strided_slice %3 {offsets = [0, 0], sizes = [16, 256], strides = [1, 1]} : vector<18x256xf32> to vector<16x256xf32>
    %5 = vector.extract_strided_slice %3 {offsets = [1, 0], sizes = [16, 256], strides = [1, 1]} : vector<18x256xf32> to vector<16x256xf32>
    %6 = vector.extract_strided_slice %3 {offsets = [2, 0], sizes = [16, 256], strides = [1, 1]} : vector<18x256xf32> to vector<16x256xf32>
    %7 = tpu.concatenate %4, %5, %6 in 1 : vector<16x256xf32>, vector<16x256xf32>, vector<16x256xf32> -> vector<16x768xf32>
    %8 = arith.truncf %7 : vector<16x768xf32> to vector<16x768xbf16>
    %c0_2 = arith.constant 0 : index
    %c0_3 = arith.constant 0 : index
    %9 = vector.load %arg2[%c0_2, %c0_3] : memref<768x256xbf16, #tpu.memory_space<vmem>>, vector<768x256xbf16>
    %cst_4 = arith.constant dense<0.000000e+00> : vector<16x256xf32>
    %10 = tpu.matmul %8, %9, %cst_4 {dimension_numbers = #tpu.dot_dimension_numbers<[1], [0], [0], [1], [0, 0, 1, 1], [], []>} : vector<16x768xbf16>, vector<768x256xbf16>, vector<16x256xf32> -> vector<16x256xf32>
    %c0_5 = arith.constant 0 : index
    %c0_6 = arith.constant 0 : index
    %11 = vector.load %arg3[%c0_5, %c0_6] : memref<1x256xf32, #tpu.memory_space<vmem>>, vector<1x256xf32>
    %12 = vector.broadcast %11 : vector<1x256xf32> to vector<16x256xf32>
    %13 = arith.addf %10, %12 : vector<16x256xf32>
    %cst_7 = arith.constant 0.000000e+00 : f32
    %14 = vector.broadcast %cst_7 : f32 to vector<16x256xf32>
    %15 = arith.maximumf %13, %14 : vector<16x256xf32>
    %cst_8 = arith.constant 0.000000e+00 : f32
    %16 = vector.broadcast %cst_8 : f32 to vector<1x256xf32>
    %17 = tpu.concatenate %16, %15, %16 in 0 : vector<1x256xf32>, vector<16x256xf32>, vector<1x256xf32> -> vector<18x256xf32>
    %18 = vector.extract_strided_slice %17 {offsets = [0, 0], sizes = [16, 256], strides = [1, 1]} : vector<18x256xf32> to vector<16x256xf32>
    %19 = vector.extract_strided_slice %17 {offsets = [1, 0], sizes = [16, 256], strides = [1, 1]} : vector<18x256xf32> to vector<16x256xf32>
    %20 = vector.extract_strided_slice %17 {offsets = [2, 0], sizes = [16, 256], strides = [1, 1]} : vector<18x256xf32> to vector<16x256xf32>
    %21 = tpu.concatenate %18, %19, %20 in 1 : vector<16x256xf32>, vector<16x256xf32>, vector<16x256xf32> -> vector<16x768xf32>
    %22 = arith.truncf %21 : vector<16x768xf32> to vector<16x768xbf16>
    %c0_9 = arith.constant 0 : index
    %c0_10 = arith.constant 0 : index
    %23 = vector.load %arg4[%c0_9, %c0_10] : memref<768x256xbf16, #tpu.memory_space<vmem>>, vector<768x256xbf16>
    %cst_11 = arith.constant dense<0.000000e+00> : vector<16x256xf32>
    %24 = tpu.matmul %22, %23, %cst_11 {dimension_numbers = #tpu.dot_dimension_numbers<[1], [0], [0], [1], [0, 0, 1, 1], [], []>} : vector<16x768xbf16>, vector<768x256xbf16>, vector<16x256xf32> -> vector<16x256xf32>
    %c0_12 = arith.constant 0 : index
    %c0_13 = arith.constant 0 : index
    %25 = vector.load %arg5[%c0_12, %c0_13] : memref<1x256xf32, #tpu.memory_space<vmem>>, vector<1x256xf32>
    %26 = vector.broadcast %25 : vector<1x256xf32> to vector<16x256xf32>
    %27 = arith.addf %24, %26 : vector<16x256xf32>
    %cst_14 = arith.constant dense<0.000000e+00> : vector<256xf32>
    %28 = vector.multi_reduction <add>, %27, %cst_14 [0] : vector<16x256xf32> to vector<256xf32>
    %29 = vector.shape_cast %28 : vector<256xf32> to vector<1x256xf32>
    %cst_15 = arith.constant 1.600000e+01 : f32
    %30 = vector.broadcast %cst_15 : f32 to vector<1x256xf32>
    %31 = arith.divf %29, %30 : vector<1x256xf32>
    %c0_16 = arith.constant 0 : index
    %c0_17 = arith.constant 0 : index
    %32 = vector.load %arg6[%c0_16, %c0_17] : memref<256x4xf32, #tpu.memory_space<vmem>>, vector<256x4xf32>
    %cst_18 = arith.constant dense<0.000000e+00> : vector<1x4xf32>
    %33 = tpu.matmul %31, %32, %cst_18 {dimension_numbers = #tpu.dot_dimension_numbers<[1], [0], [0], [1], [0, 0, 1, 1], [], []>} : vector<1x256xf32>, vector<256x4xf32>, vector<1x4xf32> -> vector<1x4xf32>
    %c0_19 = arith.constant 0 : index
    %c0_20 = arith.constant 0 : index
    %34 = vector.load %arg7[%c0_19, %c0_20] : memref<1x4xf32, #tpu.memory_space<vmem>>, vector<1x4xf32>
    %35 = arith.addf %33, %34 : vector<1x4xf32>
    %cst_21 = arith.constant 0.000000e+00 : f32
    %36 = vector.broadcast %cst_21 : f32 to vector<1x4xf32>
    %37 = arith.maximumf %35, %36 : vector<1x4xf32>
    %c0_22 = arith.constant 0 : index
    %c0_23 = arith.constant 0 : index
    %38 = vector.load %arg8[%c0_22, %c0_23] : memref<4x256xf32, #tpu.memory_space<vmem>>, vector<4x256xf32>
    %cst_24 = arith.constant dense<0.000000e+00> : vector<1x256xf32>
    %39 = tpu.matmul %37, %38, %cst_24 {dimension_numbers = #tpu.dot_dimension_numbers<[1], [0], [0], [1], [0, 0, 1, 1], [], []>} : vector<1x4xf32>, vector<4x256xf32>, vector<1x256xf32> -> vector<1x256xf32>
    %c0_25 = arith.constant 0 : index
    %c0_26 = arith.constant 0 : index
    %40 = vector.load %arg9[%c0_25, %c0_26] : memref<1x256xf32, #tpu.memory_space<vmem>>, vector<1x256xf32>
    %41 = arith.addf %39, %40 : vector<1x256xf32>
    %42 = arith.negf %41 : vector<1x256xf32>
    %43 = math.exp %42 : vector<1x256xf32>
    %cst_27 = arith.constant 1.000000e+00 : f32
    %44 = vector.broadcast %cst_27 : f32 to vector<1x256xf32>
    %45 = arith.addf %44, %43 : vector<1x256xf32>
    %46 = arith.divf %44, %45 : vector<1x256xf32>
    %47 = vector.broadcast %46 : vector<1x256xf32> to vector<16x256xf32>
    %48 = arith.mulf %27, %47 : vector<16x256xf32>
    %cst_28 = arith.constant 1.000000e+00 : f32
    %49 = vector.broadcast %cst_28 : f32 to vector<16x256xf32>
    %50 = arith.mulf %48, %49 : vector<16x256xf32>
    %c0_29 = arith.constant 0 : index
    %c0_30 = arith.constant 0 : index
    %c0_31 = arith.constant 0 : index
    %51 = vector.load %arg1[%c0_29, %c0_30, %c0_31] : memref<1x16x256xf32, #tpu.memory_space<vmem>>, vector<1x16x256xf32>
    %52 = vector.shape_cast %51 : vector<1x16x256xf32> to vector<16x256xf32>
    %53 = arith.addf %50, %52 : vector<16x256xf32>
    %c0_32 = arith.constant 0 : index
    %c0_33 = arith.constant 0 : index
    %c0_34 = arith.constant 0 : index
    %54 = vector.load %arg10[%c0_32, %c0_33, %c0_34] : memref<1x16x256xf32, #tpu.memory_space<vmem>>, vector<1x16x256xf32>
    %55 = vector.shape_cast %54 : vector<1x16x256xf32> to vector<16x256xf32>
    %56 = vector.shape_cast %53 : vector<16x256xf32> to vector<1x16x256xf32>
    tpu.vector_store %arg10[%c0_32, %c0_33, %c0_34], %56 {strides = array<i32>} : memref<1x16x256xf32, #tpu.memory_space<vmem>>, vector<1x16x256xf32>,
    return
  }
  func.func @transform_0(%arg0: i32) -> (i32, i32, i32) {
    %c0_i32 = arith.constant 0 : i32
    %c0_i32_0 = arith.constant 0 : i32
    %c0_i32_1 = arith.constant 0 : i32
    return %arg0, %c0_i32, %c0_i32_0 : i32, i32, i32
  }
  func.func @transform_1(%arg0: i32) -> (i32, i32) {
    %c0_i32 = arith.constant 0 : i32
    %c0_i32_0 = arith.constant 0 : i32
    %c0_i32_1 = arith.constant 0 : i32
    return %c0_i32, %c0_i32_0 : i32, i32
  }
  func.func @transform_2(%arg0: i32) -> (i32, i32) {
    %c0_i32 = arith.constant 0 : i32
    %c0_i32_0 = arith.constant 0 : i32
    %c0_i32_1 = arith.constant 0 : i32
    return %c0_i32, %c0_i32_0 : i32, i32
  }
  func.func @transform_3(%arg0: i32) -> (i32, i32) {
    %c0_i32 = arith.constant 0 : i32
    %c0_i32_0 = arith.constant 0 : i32
    %c0_i32_1 = arith.constant 0 : i32
    return %c0_i32, %c0_i32_0 : i32, i32
  }
  func.func @transform_4(%arg0: i32) -> (i32, i32) {
    %c0_i32 = arith.constant 0 : i32
    %c0_i32_0 = arith.constant 0 : i32
    %c0_i32_1 = arith.constant 0 : i32
    return %c0_i32, %c0_i32_0 : i32, i32
  }
  func.func @transform_5(%arg0: i32) -> (i32, i32) {
    %c0_i32 = arith.constant 0 : i32
    %c0_i32_0 = arith.constant 0 : i32
    %c0_i32_1 = arith.constant 0 : i32
    return %c0_i32, %c0_i32_0 : i32, i32
  }
  func.func @transform_6(%arg0: i32) -> (i32, i32) {
    %c0_i32 = arith.constant 0 : i32
    %c0_i32_0 = arith.constant 0 : i32
    %c0_i32_1 = arith.constant 0 : i32
    return %c0_i32, %c0_i32_0 : i32, i32
  }
  func.func @transform_7(%arg0: i32) -> (i32, i32) {
    %c0_i32 = arith.constant 0 : i32
    %c0_i32_0 = arith.constant 0 : i32
    %c0_i32_1 = arith.constant 0 : i32
    return %c0_i32, %c0_i32_0 : i32, i32
  }
  func.func @transform_8(%arg0: i32) -> (i32, i32) {
    %c0_i32 = arith.constant 0 : i32
    %c0_i32_0 = arith.constant 0 : i32
    %c0_i32_1 = arith.constant 0 : i32
    return %c0_i32, %c0_i32_0 : i32, i32
  }
  func.func @transform_9(%arg0: i32) -> (i32, i32, i32) {
    %c0_i32 = arith.constant 0 : i32
    %c0_i32_0 = arith.constant 0 : i32
    %c0_i32_1 = arith.constant 0 : i32
    return %arg0, %c0_i32, %c0_i32_0 : i32, i32, i32
  }
}

</mosaic_0001>

<llo_original>
// kernel: tpu_custom_call.1
$region0: #{tpu_custom_call.1}
  #allocation0 [shape = 'u32[]', space=smem, size = 0x4, offset = 0x4, fixed_abs, tag = 'smem constant byte address 0x4 - core index']
  #allocation1 [shape = 'u32[144,128]{1,0:T(1,128)}', space=vmem, size = 0x12000, scoped, tag = 'internal scratch']
  %s0 = inlined_call_operand.vmem [shape: f32[2,16,256], index: 0, kind: input, shape index: {}]
  %s1 = inlined_call_operand.hbm [shape: bf16[768,256], index: 1, kind: input, shape index: {}]
  %s2 = inlined_call_operand.vmem [shape: f32[1,256], index: 2, kind: input, shape index: {}]
  %s3 = inlined_call_operand.hbm [shape: bf16[768,256], index: 3, kind: input, shape index: {}]
  %s4 = inlined_call_operand.vmem [shape: f32[1,256], index: 4, kind: input, shape index: {}]
  %s5 = inlined_call_operand.vmem [shape: f32[256,4], index: 5, kind: input, shape index: {}]
  %s6 = inlined_call_operand.vmem [shape: f32[1,4], index: 6, kind: input, shape index: {}]
  %s7 = inlined_call_operand.vmem [shape: f32[4,256], index: 7, kind: input, shape index: {}]
  %s8 = inlined_call_operand.vmem [shape: f32[1,256], index: 8, kind: input, shape index: {}]
  %s9 = inlined_call_operand.hbm [shape: f32[2,16,256], index: 9, kind: output, shape index: {}]
  %s10 = sld [smem:[#allocation0]]
  $region77: #{tpu_custom_call.1} parent=0
    _
  %s12 = ssub.s32 1, %s10
  %s13 = scalar_select 0, %s12, %s10
  $region1: #{tpu_custom_call.1} parent=0
    #allocation2 [shape = 'u8[393216]{0}', space=vmem, size = 0x60000, scoped, tag = 'input window, operand 1, single buffered']
    #allocation3 [shape = 's32[2]{0}', space=sflag, size = 0x8, scoped, tag = 'scoped memory for tpu_custom_call.1']
    #allocation4 [shape = 's32[2]{0}', space=sflag, size = 0x8, scoped, tag = 'scoped memory for tpu_custom_call.1']
    #allocation5 [shape = 'u8[393216]{0}', space=vmem, size = 0x60000, scoped, tag = 'input window, operand 3, single buffered']
    #allocation6 [shape = 's32[1]{0}', space=sflag, size = 0x4, scoped, tag = 'scoped memory for tpu_custom_call.1']
    #allocation7 [shape = 'u8[32768]{0}', space=vmem, size = 0x8000, scoped, tag = 'output window, operand 0']
    %14 = vsyncpa [#allocation3], 0
    %15 = vsyncpa [#allocation6], 0
    %16 = vsyncpa [#allocation4], 0
    %s17 = scalar_lea.sflag [#allocation4], 1
    %18 = vsyncpa %s17, 0
    loop: start=0, step=1, limit=4
    $region2: #{tpu_custom_call.1} parent=1 // loop_pre_header
      _
    $region3: #{tpu_custom_call.1} parent=1 // loop_header
      %s20 = sphi 0, %s24
      %p21 = scmp.ge.s32.totalorder %s20, 4
      %s30 = sphi 0, %s32
      %s33 = sphi 0, %s30
      %s34 = sphi 0, %s33
      %s50 = sphi 0, %s34
      %s54 = sphi 0, %s54
      %s56 = sphi 0, %s54
      %s57 = sphi 0, %s56
      %s71 = sphi 0, %s57
      %s75 = sphi 0, %s75
      %s77 = sphi 0, %s75
      %s78 = sphi 0, %s77
      %s92 = sphi 0, %s78
      %s96 = sphi 0, %s96
      %s98 = sphi 0, %s96
      %s99 = sphi 0, %s98
      %s113 = sphi 0, %s99
      %s117 = sphi 0, %s117
      %s119 = sphi 0, %s117
      %s120 = sphi 0, %s119
      %s134 = sphi 0, %s120
      %s138 = sphi 0, %s138
      %s140 = sphi 0, %s138
      %s141 = sphi 0, %s140
      %s155 = sphi 0, %s141
      %s159 = sphi 0, %s159
      %s161 = sphi 0, %s159
      %s162 = sphi 0, %s161
      %s176 = sphi 0, %s162
      %s180 = sphi 0, %s180
      %s182 = sphi 0, %s180
      %s183 = sphi 0, %s182
      %s197 = sphi 0, %s183
      %s201 = sphi 0, %s201
      %s203 = sphi 0, %s201
      %s204 = sphi 0, %s203
      %s218 = sphi 0, %s204
      %s224 = sphi 0, %s226
      %s227 = sphi 0, %s224
      %s228 = sphi 0, %s227
      %s244 = sphi 0, %s228
    $region4: #{tpu_custom_call.1} parent=1 // loop_header_branch
      %23 = sbr.rel (%p21) target = $region8
    $region5: #{tpu_custom_call.1} parent=1 // loop_body
      %s25 = ssub.s32 %s20, 1
      %s26 = ssub.s32 %s20, 2
      %s27 = sadd.s32 %s20, 1
      %s28 = ssub.s32 %s20, %s27
      %p29 = scmp.eq.s32.totalorder %s28, 0
      %s31 = sadd.s32 %s30, 1
      %s32 = scalar_select %p29, %s30, %s31
      %p35 = pneg %p29
      %p36 = scmp.eq.s32.totalorder %s20, 1
      %p37 = por %p35, %p36
      %p38 = scmp.ne.s32.totalorder %s30, %s33
      %p39 = scmp.eq.s32.totalorder %s20, 0
      %p40 = por %p38, %p39
      %p41 = scmp.ne.s32.totalorder %s30, %s33
      %p42 = scmp.eq.s32.totalorder %s25, 1
      %p43 = por %p41, %p42
      %p44 = scmp.ne.s32.totalorder %s33, %s34
      %p45 = scmp.eq.s32.totalorder %s25, 0
      %p46 = por %p44, %p45
      %p47 = scmp.ne.s32.totalorder %s33, %s34
      %p48 = scmp.eq.s32.totalorder %s26, 1
      %p49 = por %p47, %p48
      %p51 = scmp.ne.s32.totalorder %s34, %s50
      %p52 = scmp.eq.s32.totalorder %s26, 0
      %p53 = por %p51, %p52
      %s55 = sadd.s32 %s54, 1
      %p58 = scmp.eq.s32.totalorder %s20, 1
      %p59 = scmp.ne.s32.totalorder %s54, %s56
      %p60 = scmp.eq.s32.totalorder %s20, 0
      %p61 = por %p59, %p60
      %p62 = scmp.ne.s32.totalorder %s54, %s56
      %p63 = scmp.eq.s32.totalorder %s25, 1
      %p64 = por %p62, %p63
      %p65 = scmp.ne.s32.totalorder %s56, %s57
      %p66 = scmp.eq.s32.totalorder %s25, 0
      %p67 = por %p65, %p66
      %p68 = scmp.ne.s32.totalorder %s56, %s57
      %p69 = scmp.eq.s32.totalorder %s26, 1
      %p70 = por %p68, %p69
      %p72 = scmp.ne.s32.totalorder %s57, %s71
      %p73 = scmp.eq.s32.totalorder %s26, 0
      %p74 = por %p72, %p73
      %s76 = sadd.s32 %s75, 1
      %p79 = scmp.eq.s32.totalorder %s20, 1
      %p80 = scmp.ne.s32.totalorder %s75, %s77
      %p81 = scmp.eq.s32.totalorder %s20, 0
      %p82 = por %p80, %p81
      %p83 = scmp.ne.s32.totalorder %s75, %s77
      %p84 = scmp.eq.s32.totalorder %s25, 1
      %p85 = por %p83, %p84
      %p86 = scmp.ne.s32.totalorder %s77, %s78
      %p87 = scmp.eq.s32.totalorder %s25, 0
      %p88 = por %p86, %p87
      %p89 = scmp.ne.s32.totalorder %s77, %s78
      %p90 = scmp.eq.s32.totalorder %s26, 1
      %p91 = por %p89, %p90
      %p93 = scmp.ne.s32.totalorder %s78, %s92
      %p94 = scmp.eq.s32.totalorder %s26, 0
      %p95 = por %p93, %p94
      %s97 = sadd.s32 %s96, 1
      %p100 = scmp.eq.s32.totalorder %s20, 1
      %p101 = scmp.ne.s32.totalorder %s96, %s98
      %p102 = scmp.eq.s32.totalorder %s20, 0
      %p103 = por %p101, %p102
      %p104 = scmp.ne.s32.totalorder %s96, %s98
      %p105 = scmp.eq.s32.totalorder %s25, 1
      %p106 = por %p104, %p105
      %p107 = scmp.ne.s32.totalorder %s98, %s99
      %p108 = scmp.eq.s32.totalorder %s25, 0
      %p109 = por %p107, %p108
      %p110 = scmp.ne.s32.totalorder %s98, %s99
      %p111 = scmp.eq.s32.totalorder %s26, 1
      %p112 = por %p110, %p111
      %p114 = scmp.ne.s32.totalorder %s99, %s113
      %p115 = scmp.eq.s32.totalorder %s26, 0
      %p116 = por %p114, %p115
      %s118 = sadd.s32 %s117, 1
      %p121 = scmp.eq.s32.totalorder %s20, 1
      %p122 = scmp.ne.s32.totalorder %s117, %s119
      %p123 = scmp.eq.s32.totalorder %s20, 0
      %p124 = por %p122, %p123
      %p125 = scmp.ne.s32.totalorder %s117, %s119
      %p126 = scmp.eq.s32.totalorder %s25, 1
      %p127 = por %p125, %p126
      %p128 = scmp.ne.s32.totalorder %s119, %s120
      %p129 = scmp.eq.s32.totalorder %s25, 0
      %p130 = por %p128, %p129
      %p131 = scmp.ne.s32.totalorder %s119, %s120
      %p132 = scmp.eq.s32.totalorder %s26, 1
      %p133 = por %p131, %p132
      %p135 = scmp.ne.s32.totalorder %s120, %s134
      %p136 = scmp.eq.s32.totalorder %s26, 0
      %p137 = por %p135, %p136
      %s139 = sadd.s32 %s138, 1
      %p142 = scmp.eq.s32.totalorder %s20, 1
      %p143 = scmp.ne.s32.totalorder %s138, %s140
      %p144 = scmp.eq.s32.totalorder %s20, 0
      %p145 = por %p143, %p144
      %p146 = scmp.ne.s32.totalorder %s138, %s140
      %p147 = scmp.eq.s32.totalorder %s25, 1
      %p148 = por %p146, %p147
      %p149 = scmp.ne.s32.totalorder %s140, %s141
      %p150 = scmp.eq.s32.totalorder %s25, 0
      %p151 = por %p149, %p150
      %p152 = scmp.ne.s32.totalorder %s140, %s141
      %p153 = scmp.eq.s32.totalorder %s26, 1
      %p154 = por %p152, %p153
      %p156 = scmp.ne.s32.totalorder %s141, %s155
      %p157 = scmp.eq.s32.totalorder %s26, 0
      %p158 = por %p156, %p157
      %s160 = sadd.s32 %s159, 1
      %p163 = scmp.eq.s32.totalorder %s20, 1
      %p164 = scmp.ne.s32.totalorder %s159, %s161
      %p165 = scmp.eq.s32.totalorder %s20, 0
      %p166 = por %p164, %p165
      %p167 = scmp.ne.s32.totalorder %s159, %s161
      %p168 = scmp.eq.s32.totalorder %s25, 1
      %p169 = por %p167, %p168
      %p170 = scmp.ne.s32.totalorder %s161, %s162
      %p171 = scmp.eq.s32.totalorder %s25, 0
      %p172 = por %p170, %p171
      %p173 = scmp.ne.s32.totalorder %s161, %s162
      %p174 = scmp.eq.s32.totalorder %s26, 1
      %p175 = por %p173, %p174
      %p177 = scmp.ne.s32.totalorder %s162, %s176
      %p178 = scmp.eq.s32.totalorder %s26, 0
      %p179 = por %p177, %p178
      %s181 = sadd.s32 %s180, 1
      %p184 = scmp.eq.s32.totalorder %s20, 1
      %p185 = scmp.ne.s32.totalorder %s180, %s182
      %p186 = scmp.eq.s32.totalorder %s20, 0
      %p187 = por %p185, %p186
      %p188 = scmp.ne.s32.totalorder %s180, %s182
      %p189 = scmp.eq.s32.totalorder %s25, 1
      %p190 = por %p188, %p189
      %p191 = scmp.ne.s32.totalorder %s182, %s183
      %p192 = scmp.eq.s32.totalorder %s25, 0
      %p193 = por %p191, %p192
      %p194 = scmp.ne.s32.totalorder %s182, %s183
      %p195 = scmp.eq.s32.totalorder %s26, 1
      %p196 = por %p194, %p195
      %p198 = scmp.ne.s32.totalorder %s183, %s197
      %p199 = scmp.eq.s32.totalorder %s26, 0
      %p200 = por %p198, %p199
      %s202 = sadd.s32 %s201, 1
      %p205 = scmp.eq.s32.totalorder %s20, 1
      %p206 = scmp.ne.s32.totalorder %s201, %s203
      %p207 = scmp.eq.s32.totalorder %s20, 0
      %p208 = por %p206, %p207
      %p209 = scmp.ne.s32.totalorder %s201, %s203
      %p210 = scmp.eq.s32.totalorder %s25, 1
      %p211 = por %p209, %p210
      %p212 = scmp.ne.s32.totalorder %s203, %s204
      %p213 = scmp.eq.s32.totalorder %s25, 0
      %p214 = por %p212, %p213
      %p215 = scmp.ne.s32.totalorder %s203, %s204
      %p216 = scmp.eq.s32.totalorder %s26, 1
      %p217 = por %p215, %p216
      %p219 = scmp.ne.s32.totalorder %s204, %s218
      %p220 = scmp.eq.s32.totalorder %s26, 0
      %p221 = por %p219, %p220
      %s222 = ssub.s32 %s20, %s27
      %p223 = scmp.eq.s32.totalorder %s222, 0
      %s225 = sadd.s32 %s224, 1
      %s226 = scalar_select %p223, %s224, %s225
      %p229 = pneg %p223
      %p230 = scmp.eq.s32.totalorder %s20, 1
      %p231 = por %p229, %p230
      %p232 = scmp.ne.s32.totalorder %s224, %s227
      %p233 = scmp.eq.s32.totalorder %s20, 0
      %p234 = por %p232, %p233
      %p235 = scmp.ne.s32.totalorder %s224, %s227
      %p236 = scmp.eq.s32.totalorder %s25, 1
      %p237 = por %p235, %p236
      %p238 = scmp.ne.s32.totalorder %s227, %s228
      %p239 = scmp.eq.s32.totalorder %s25, 0
      %p240 = por %p238, %p239
      %p241 = scmp.ne.s32.totalorder %s227, %s228
      %p242 = scmp.eq.s32.totalorder %s26, 1
      %p243 = por %p241, %p242
      %p245 = scmp.ne.s32.totalorder %s228, %s244
      %p246 = scmp.eq.s32.totalorder %s26, 0
      %p247 = por %p245, %p246
      %p248 = scmp.le.s32.totalorder 1, %s20
      %p249 = scmp.lt.s32.totalorder %s20, 3
      %p250 = pnand %p248, %p249
      %p251 = pneg %p250
      // Predicated region
      $region9: #{tpu_custom_call.1} parent=5 // pred_check
        _
      $region10: #{tpu_custom_call.1} parent=5 // pred_check_branch
        %253 = sbr.rel (%p250) target = $region12
      $region11: #{tpu_custom_call.1} parent=5 // pred_region
        %s254 = ssub.s32 %s20, 1
        // Predicated region
        $region13: #{tpu_custom_call.1} parent=11 // pred_check
          %p255 = pneg %p67
        $region14: #{tpu_custom_call.1} parent=11 // pred_check_branch
          %257 = sbr.rel (%p255) target = $region16
        $region15: #{tpu_custom_call.1} parent=11 // pred_region
          %s259 = ssub.s32 12288, 12288
          %260 = vsyncadd [#allocation3], %s259
          %s261 = sshll.u32 [#allocation2], 4
          %s262 = int_to_ptr.vmem [resolvable:$true] %s261
          %267 = dma.hbm_to_vmem [thread:$0]  %s1, 12288, %s262, [#allocation3], 128, 128, 8
        $region16: #{tpu_custom_call.1} parent=11 // pred_fallthru
          _
        // Predicated region
        $region17: #{tpu_custom_call.1} parent=11 // pred_check
          %p268 = pneg %p88
        $region18: #{tpu_custom_call.1} parent=11 // pred_check_branch
          %270 = sbr.rel (%p268) target = $region20
        $region19: #{tpu_custom_call.1} parent=11 // pred_region
          _
        $region20: #{tpu_custom_call.1} parent=11 // pred_fallthru
          _
        // Predicated region
        $region21: #{tpu_custom_call.1} parent=11 // pred_check
          %p271 = pneg %p109
        $region22: #{tpu_custom_call.1} parent=11 // pred_check_branch
          %273 = sbr.rel (%p271) target = $region24
        $region23: #{tpu_custom_call.1} parent=11 // pred_region
          %s275 = ssub.s32 12288, 12288
          %276 = vsyncadd [#allocation6], %s275
          %s277 = sshll.u32 [#allocation5], 4
          %s278 = int_to_ptr.vmem [resolvable:$true] %s277
          %283 = dma.hbm_to_vmem [thread:$0]  %s3, 12288, %s278, [#allocation6], 128, 128, 8
        $region24: #{tpu_custom_call.1} parent=11 // pred_fallthru
          _
        // Predicated region
        $region25: #{tpu_custom_call.1} parent=11 // pred_check
          %p284 = pneg %p130
        $region26: #{tpu_custom_call.1} parent=11 // pred_check_branch
          %286 = sbr.rel (%p284) target = $region28
        $region27: #{tpu_custom_call.1} parent=11 // pred_region
          _
        $region28: #{tpu_custom_call.1} parent=11 // pred_fallthru
          _
        // Predicated region
        $region29: #{tpu_custom_call.1} parent=11 // pred_check
          %p287 = pneg %p151
        $region30: #{tpu_custom_call.1} parent=11 // pred_check_branch
          %289 = sbr.rel (%p287) target = $region32
        $region31: #{tpu_custom_call.1} parent=11 // pred_region
          _
        $region32: #{tpu_custom_call.1} parent=11 // pred_fallthru
          _
        // Predicated region
        $region33: #{tpu_custom_call.1} parent=11 // pred_check
          %p290 = pneg %p172
        $region34: #{tpu_custom_call.1} parent=11 // pred_check_branch
          %292 = sbr.rel (%p290) target = $region36
        $region35: #{tpu_custom_call.1} parent=11 // pred_region
          _
        $region36: #{tpu_custom_call.1} parent=11 // pred_fallthru
          _
        // Predicated region
        $region37: #{tpu_custom_call.1} parent=11 // pred_check
          %p293 = pneg %p193
        $region38: #{tpu_custom_call.1} parent=11 // pred_check_branch
          %295 = sbr.rel (%p293) target = $region40
        $region39: #{tpu_custom_call.1} parent=11 // pred_region
          _
        $region40: #{tpu_custom_call.1} parent=11 // pred_fallthru
          _
        // Predicated region
        $region41: #{tpu_custom_call.1} parent=11 // pred_check
          %p296 = pneg %p214
        $region42: #{tpu_custom_call.1} parent=11 // pred_check_branch
          %298 = sbr.rel (%p296) target = $region44
        $region43: #{tpu_custom_call.1} parent=11 // pred_region
          _
        $region44: #{tpu_custom_call.1} parent=11 // pred_fallthru
          _
      $region12: #{tpu_custom_call.1} parent=5 // pred_fallthru
        _
      %p299 = scmp.lt.s32.totalorder %s20, 2
      // Predicated region
      $region45: #{tpu_custom_call.1} parent=5 // pred_check
        %p300 = pneg %p299
      $region46: #{tpu_custom_call.1} parent=5 // pred_check_branch
        %302 = sbr.rel (%p300) target = $region48
      $region47: #{tpu_custom_call.1} parent=5 // pred_region
        // Predicated region
        $region49: #{tpu_custom_call.1} parent=47 // pred_check
          %p303 = pneg %p40
        $region50: #{tpu_custom_call.1} parent=47 // pred_check_branch
          %305 = sbr.rel (%p303) target = $region52
        $region51: #{tpu_custom_call.1} parent=47 // pred_region
          %p306 = scmp.lt.s32.totalorder %s20, 1
          %s307 = scalar_select %p306, %s20, 1
          %s308 = smul.addr %s307, 4
          %s309 = smul.addr %s308, 8
          %s310 = scalar_lea.vmem %s0, %s309
        $region52: #{tpu_custom_call.1} parent=47 // pred_fallthru
          _
      $region48: #{tpu_custom_call.1} parent=5 // pred_fallthru
        _
      %p311 = scmp.le.s32.totalorder 1, %s20
      %p312 = scmp.lt.s32.totalorder %s20, 3
      %p313 = pnand %p311, %p312
      %p314 = pneg %p313
      // Predicated region
      $region53: #{tpu_custom_call.1} parent=5 // pred_check
        _
      $region54: #{tpu_custom_call.1} parent=5 // pred_check_branch
        %316 = sbr.rel (%p313) target = $region56
      $region55: #{tpu_custom_call.1} parent=5 // pred_region
        %s317 = ssub.s32 %s20, 1
        // Predicated region
        $region57: #{tpu_custom_call.1} parent=55 // pred_check
          %p318 = pneg %p67
        $region58: #{tpu_custom_call.1} parent=55 // pred_check_branch
          %320 = sbr.rel (%p318) target = $region60
        $region59: #{tpu_custom_call.1} parent=55 // pred_region
          %321 = dma.done [#allocation3], 12288
        $region60: #{tpu_custom_call.1} parent=55 // pred_fallthru
          _
        // Predicated region
        $region61: #{tpu_custom_call.1} parent=55 // pred_check
          %p322 = pneg %p109
        $region62: #{tpu_custom_call.1} parent=55 // pred_check_branch
          %324 = sbr.rel (%p322) target = $region64
        $region63: #{tpu_custom_call.1} parent=55 // pred_region
          %325 = dma.done [#allocation6], 12288
        $region64: #{tpu_custom_call.1} parent=55 // pred_fallthru
          _
        %p326 = scmp.lt.s32.totalorder %s25, 1
        %s327 = scalar_select %p326, %s25, 1
        %s328 = smul.addr %s327, 4
        %s329 = smul.addr %s328, 8
        %s330 = scalar_lea.vmem %s0, %s329
        %p331 = pneg %p46
        %p332 = pneg %p43
        %p333 = pneg %p67
        %p334 = pneg %p64
        %p335 = pneg %p88
        %p336 = pneg %p85
        %p337 = pneg %p109
        %p338 = pneg %p106
        %p339 = pneg %p130
        %p340 = pneg %p127
        %p341 = pneg %p151
        %p342 = pneg %p148
        %p343 = pneg %p172
        %p344 = pneg %p169
        %p345 = pneg %p193
        %p346 = pneg %p190
        %p347 = pneg %p214
        %p348 = pneg %p211
        %p349 = pneg %p240
        %p350 = pneg %p237
        %s351 = sand.u32 %s227, 1
        %s352 = scalar_lea.sflag [#allocation4], %s351
        %s353 = sand.u32 %s227, 1
        %s354 = smul.addr %s353, 32
        %s355 = scalar_lea.vmem [#allocation7], %s354
        %p356 = scmp.lt.s32.totalorder %s25, 1
        %s357 = scalar_select %p356, %s25, 1
        %s358 = smul.addr %s357, 4
        %s359 = smul.addr %s358, 8
        %s360 = scalar_lea.vmem %s0, %s359
        %v361 = vld [vmem:[%s360] sm:$0xff]
        %v362 = vld [vmem:[%s360 + $0x8] sm:$0xff]
        %v363 = vld [vmem:[%s360 + $0x10] sm:$0xff]
        %v364 = vld [vmem:[%s360 + $0x18] sm:$0xff]
        %vm369 = vcmask 1040384
        %v370 = vrot.slane %v361, 7
        %v371 = vrot.slane %v362, 7
        %v372 = vrot.slane %v363, 7
        %v373 = vsel %vm369, %v370, %v372
        %v374 = vrot.slane %v364, 7
        %v375 = vsel %vm369, %v371, %v374
        %v382 = vsel %vm369, 0.0, %v370
        %v383 = vsel %vm369, 0.0, %v371
        %v384 = vsel %vm369, %v372, 0.0
        %v385 = vsel %vm369, %v374, 0.0
        %vm390 = vcmask 1046528
        %v391 = vrot.slane %v382, 1
        %v392 = vrot.slane %v373, 1
        %v393 = vsel %vm390, %v391, %v392
        %v394 = vrot.slane %v383, 1
        %v395 = vrot.slane %v375, 1
        %v396 = vsel %vm390, %v394, %v395
        %v397 = vrot.slane %v384, 1
        %v398 = vsel %vm390, %v392, %v397
        %v399 = vrot.slane %v385, 1
        %v400 = vsel %vm390, %v395, %v399
        %vm405 = vcmask 1045504
        %v406 = vrot.slane %v382, 2
        %v407 = vrot.slane %v373, 2
        %v408 = vsel %vm405, %v406, %v407
        %v409 = vrot.slane %v383, 2
        %v410 = vrot.slane %v375, 2
        %v411 = vsel %vm405, %v409, %v410
        %v412 = vrot.slane %v384, 2
        %v413 = vsel %vm405, %v407, %v412
        %v414 = vrot.slane %v385, 2
        %v415 = vsel %vm405, %v410, %v414
        %v420 = vpack.c.bf16 %v373, %v382
        %v421 = vpack.c.bf16 %v375, %v383
        %v422 = vpack.c.bf16 %v398, %v393
        %v423 = vpack.c.bf16 %v400, %v396
        %v424 = vpack.c.bf16 %v413, %v408
        %v425 = vpack.c.bf16 %v415, %v411
        %v426 = vld [vmem:[#allocation2] sm:$0xff]
        %v427 = vld [vmem:[#allocation2 + $0x8] sm:$0xff]
        %v428 = vld [vmem:[#allocation2 + $0x10] sm:$0xff]
        %v429 = vld [vmem:[#allocation2 + $0x18] sm:$0xff]
        %v430 = vld [vmem:[#allocation2 + $0x20] sm:$0xff]
        %v431 = vld [vmem:[#allocation2 + $0x28] sm:$0xff]
        %v432 = vld [vmem:[#allocation2 + $0x30] sm:$0xff]
        %v433 = vld [vmem:[#allocation2 + $0x38] sm:$0xff]
        %v434 = vld [vmem:[#allocation2 + $0x40] sm:$0xff]
        %v435 = vld [vmem:[#allocation2 + $0x48] sm:$0xff]
        %v436 = vld [vmem:[#allocation2 + $0x50] sm:$0xff]
        %v437 = vld [vmem:[#allocation2 + $0x58] sm:$0xff]
        %v438 = vld [vmem:[#allocation2 + $0x60] sm:$0xff]
        %v439 = vld [vmem:[#allocation2 + $0x68] sm:$0xff]
        %v440 = vld [vmem:[#allocation2 + $0x70] sm:$0xff]
        %v441 = vld [vmem:[#allocation2 + $0x78] sm:$0xff]
        %v442 = vld [vmem:[#allocation2 + $0x80] sm:$0xff]
        %v443 = vld [vmem:[#allocation2 + $0x88] sm:$0xff]
        %v444 = vld [vmem:[#allocation2 + $0x90] sm:$0xff]
        %v445 = vld [vmem:[#allocation2 + $0x98] sm:$0xff]
        %v446 = vld [vmem:[#allocation2 + $0xa0] sm:$0xff]
        %v447 = vld [vmem:[#allocation2 + $0xa8] sm:$0xff]
        %v448 = vld [vmem:[#allocation2 + $0xb0] sm:$0xff]
        %v449 = vld [vmem:[#allocation2 + $0xb8] sm:$0xff]
        %v450 = vld [vmem:[#allocation2 + $0xc0] sm:$0xff]
        %v451 = vld [vmem:[#allocation2 + $0xc8] sm:$0xff]
        %v452 = vld [vmem:[#allocation2 + $0xd0] sm:$0xff]
        %v453 = vld [vmem:[#allocation2 + $0xd8] sm:$0xff]
        %v454 = vld [vmem:[#allocation2 + $0xe0] sm:$0xff]
        %v455 = vld [vmem:[#allocation2 + $0xe8] sm:$0xff]
        %v456 = vld [vmem:[#allocation2 + $0xf0] sm:$0xff]
        %v457 = vld [vmem:[#allocation2 + $0xf8] sm:$0xff]
        %v458 = vld [vmem:[#allocation2 + $0x100] sm:$0xff]
        %v459 = vld [vmem:[#allocation2 + $0x108] sm:$0xff]
        %v460 = vld [vmem:[#allocation2 + $0x110] sm:$0xff]
        %v461 = vld [vmem:[#allocation2 + $0x118] sm:$0xff]
        %v462 = vld [vmem:[#allocation2 + $0x120] sm:$0xff]
        %v463 = vld [vmem:[#allocation2 + $0x128] sm:$0xff]
        %v464 = vld [vmem:[#allocation2 + $0x130] sm:$0xff]
        %v465 = vld [vmem:[#allocation2 + $0x138] sm:$0xff]
        %v466 = vld [vmem:[#allocation2 + $0x140] sm:$0xff]
        %v467 = vld [vmem:[#allocation2 + $0x148] sm:$0xff]
        %v468 = vld [vmem:[#allocation2 + $0x150] sm:$0xff]
        %v469 = vld [vmem:[#allocation2 + $0x158] sm:$0xff]
        %v470 = vld [vmem:[#allocation2 + $0x160] sm:$0xff]
        %v471 = vld [vmem:[#allocation2 + $0x168] sm:$0xff]
        %v472 = vld [vmem:[#allocation2 + $0x170] sm:$0xff]
        %v473 = vld [vmem:[#allocation2 + $0x178] sm:$0xff]
        %v474 = vld [vmem:[#allocation2 + $0x180] sm:$0xff]
        %v475 = vld [vmem:[#allocation2 + $0x188] sm:$0xff]
        %v476 = vld [vmem:[#allocation2 + $0x190] sm:$0xff]
        %v477 = vld [vmem:[#allocation2 + $0x198] sm:$0xff]
        %v478 = vld [vmem:[#allocation2 + $0x1a0] sm:$0xff]
        %v479 = vld [vmem:[#allocation2 + $0x1a8] sm:$0xff]
        %v480 = vld [vmem:[#allocation2 + $0x1b0] sm:$0xff]
        %v481 = vld [vmem:[#allocation2 + $0x1b8] sm:$0xff]
        %v482 = vld [vmem:[#allocation2 + $0x1c0] sm:$0xff]
        %v483 = vld [vmem:[#allocation2 + $0x1c8] sm:$0xff]
        %v484 = vld [vmem:[#allocation2 + $0x1d0] sm:$0xff]
        %v485 = vld [vmem:[#allocation2 + $0x1d8] sm:$0xff]
        %v486 = vld [vmem:[#allocation2 + $0x1e0] sm:$0xff]
        %v487 = vld [vmem:[#allocation2 + $0x1e8] sm:$0xff]
        %v488 = vld [vmem:[#allocation2 + $0x1f0] sm:$0xff]
        %v489 = vld [vmem:[#allocation2 + $0x1f8] sm:$0xff]
        %v490 = vld [vmem:[#allocation2 + $0x200] sm:$0xff]
        %v491 = vld [vmem:[#allocation2 + $0x208] sm:$0xff]
        %v492 = vld [vmem:[#allocation2 + $0x210] sm:$0xff]
        %v493 = vld [vmem:[#allocation2 + $0x218] sm:$0xff]
        %v494 = vld [vmem:[#allocation2 + $0x220] sm:$0xff]
        %v495 = vld [vmem:[#allocation2 + $0x228] sm:$0xff]
        %v496 = vld [vmem:[#allocation2 + $0x230] sm:$0xff]
        %v497 = vld [vmem:[#allocation2 + $0x238] sm:$0xff]
        %v498 = vld [vmem:[#allocation2 + $0x240] sm:$0xff]
        %v499 = vld [vmem:[#allocation2 + $0x248] sm:$0xff]
        %v500 = vld [vmem:[#allocation2 + $0x250] sm:$0xff]
        %v501 = vld [vmem:[#allocation2 + $0x258] sm:$0xff]
        %v502 = vld [vmem:[#allocation2 + $0x260] sm:$0xff]
        %v503 = vld [vmem:[#allocation2 + $0x268] sm:$0xff]
        %v504 = vld [vmem:[#allocation2 + $0x270] sm:$0xff]
        %v505 = vld [vmem:[#allocation2 + $0x278] sm:$0xff]
        %v506 = vld [vmem:[#allocation2 + $0x280] sm:$0xff]
        %v507 = vld [vmem:[#allocation2 + $0x288] sm:$0xff]
        %v508 = vld [vmem:[#allocation2 + $0x290] sm:$0xff]
        %v509 = vld [vmem:[#allocation2 + $0x298] sm:$0xff]
        %v510 = vld [vmem:[#allocation2 + $0x2a0] sm:$0xff]
        %v511 = vld [vmem:[#allocation2 + $0x2a8] sm:$0xff]
        %v512 = vld [vmem:[#allocation2 + $0x2b0] sm:$0xff]
        %v513 = vld [vmem:[#allocation2 + $0x2b8] sm:$0xff]
        %v514 = vld [vmem:[#allocation2 + $0x2c0] sm:$0xff]
        %v515 = vld [vmem:[#allocation2 + $0x2c8] sm:$0xff]
        %v516 = vld [vmem:[#allocation2 + $0x2d0] sm:$0xff]
        %v517 = vld [vmem:[#allocation2 + $0x2d8] sm:$0xff]
        %v518 = vld [vmem:[#allocation2 + $0x2e0] sm:$0xff]
        %v519 = vld [vmem:[#allocation2 + $0x2e8] sm:$0xff]
        %v520 = vld [vmem:[#allocation2 + $0x2f0] sm:$0xff]
        %v521 = vld [vmem:[#allocation2 + $0x2f8] sm:$0xff]
        %v522 = vld [vmem:[%s2] sm:$0x3]
        %v524 = vlaneseq
        %v525 = vshrl.u32 %v524, 7
        %v526 = vsub.s32 0, %v525
        %v527 = vrot.slane %v522, %v526
        %v528 = vlaneseq
        %v529 = vshrl.u32 %v528, 7
        %v530 = vsub.s32 1, %v529
        %v531 = vrot.slane %v522, %v530
        %v630 = vunpack.c.l.b16 %v426
        %v631 = vunpack.c.h.b16 %v426
        %v632 = vunpack.c.l.b16 %v427
        %v633 = vunpack.c.h.b16 %v427
        %v634 = vunpack.c.l.b16 %v428
        %v635 = vunpack.c.h.b16 %v428
        %v636 = vunpack.c.l.b16 %v429
        %v637 = vunpack.c.h.b16 %v429
        %v638 = vunpack.c.l.b16 %v430
        %v639 = vunpack.c.h.b16 %v430
        %v640 = vunpack.c.l.b16 %v431
        %v641 = vunpack.c.h.b16 %v431
        %v642 = vunpack.c.l.b16 %v432
        %v643 = vunpack.c.h.b16 %v432
        %v644 = vunpack.c.l.b16 %v433
        %v645 = vunpack.c.h.b16 %v433
        %v646 = vunpack.c.l.b16 %v434
        %v647 = vunpack.c.h.b16 %v434
        %v648 = vunpack.c.l.b16 %v435
        %v649 = vunpack.c.h.b16 %v435
        %v650 = vunpack.c.l.b16 %v436
        %v651 = vunpack.c.h.b16 %v436
        %v652 = vunpack.c.l.b16 %v437
        %v653 = vunpack.c.h.b16 %v437
        %v654 = vunpack.c.l.b16 %v438
        %v655 = vunpack.c.h.b16 %v438
        %v656 = vunpack.c.l.b16 %v439
        %v657 = vunpack.c.h.b16 %v439
        %v658 = vunpack.c.l.b16 %v440
        %v659 = vunpack.c.h.b16 %v440
        %v660 = vunpack.c.l.b16 %v441
        %v661 = vunpack.c.h.b16 %v441
        %v662 = vunpack.c.l.b16 %v442
        %v663 = vunpack.c.h.b16 %v442
        %v664 = vunpack.c.l.b16 %v443
        %v665 = vunpack.c.h.b16 %v443
        %v666 = vunpack.c.l.b16 %v444
        %v667 = vunpack.c.h.b16 %v444
        %v668 = vunpack.c.l.b16 %v445
        %v669 = vunpack.c.h.b16 %v445
        %v670 = vunpack.c.l.b16 %v446
        %v671 = vunpack.c.h.b16 %v446
        %v672 = vunpack.c.l.b16 %v447
        %v673 = vunpack.c.h.b16 %v447
        %v674 = vunpack.c.l.b16 %v448
        %v675 = vunpack.c.h.b16 %v448
        %v676 = vunpack.c.l.b16 %v449
        %v677 = vunpack.c.h.b16 %v449
        %v678 = vunpack.c.l.b16 %v450
        %v679 = vunpack.c.h.b16 %v450
        %v680 = vunpack.c.l.b16 %v451
        %v681 = vunpack.c.h.b16 %v451
        %v682 = vunpack.c.l.b16 %v452
        %v683 = vunpack.c.h.b16 %v452
        %v684 = vunpack.c.l.b16 %v453
        %v685 = vunpack.c.h.b16 %v453
        %v686 = vunpack.c.l.b16 %v454
        %v687 = vunpack.c.h.b16 %v454
        %v688 = vunpack.c.l.b16 %v455
        %v689 = vunpack.c.h.b16 %v455
        %v690 = vunpack.c.l.b16 %v456
        %v691 = vunpack.c.h.b16 %v456
        %v692 = vunpack.c.l.b16 %v457
        %v693 = vunpack.c.h.b16 %v457
        %v694 = vunpack.c.l.b16 %v458
        %v695 = vunpack.c.h.b16 %v458
        %v696 = vunpack.c.l.b16 %v459
        %v697 = vunpack.c.h.b16 %v459
        %v698 = vunpack.c.l.b16 %v460
        %v699 = vunpack.c.h.b16 %v460
        %v700 = vunpack.c.l.b16 %v461
        %v701 = vunpack.c.h.b16 %v461
        %v702 = vunpack.c.l.b16 %v462
        %v703 = vunpack.c.h.b16 %v462
        %v704 = vunpack.c.l.b16 %v463
        %v705 = vunpack.c.h.b16 %v463
        %v706 = vunpack.c.l.b16 %v464
        %v707 = vunpack.c.h.b16 %v464
        %v708 = vunpack.c.l.b16 %v465
        %v709 = vunpack.c.h.b16 %v465
        %v710 = vunpack.c.l.b16 %v466
        %v711 = vunpack.c.h.b16 %v466
        %v712 = vunpack.c.l.b16 %v467
        %v713 = vunpack.c.h.b16 %v467
        %v714 = vunpack.c.l.b16 %v468
        %v715 = vunpack.c.h.b16 %v468
        %v716 = vunpack.c.l.b16 %v469
        %v717 = vunpack.c.h.b16 %v469
        %v718 = vunpack.c.l.b16 %v470
        %v719 = vunpack.c.h.b16 %v470
        %v720 = vunpack.c.l.b16 %v471
        %v721 = vunpack.c.h.b16 %v471
        %v722 = vunpack.c.l.b16 %v472
        %v723 = vunpack.c.h.b16 %v472
        %v724 = vunpack.c.l.b16 %v473
        %v725 = vunpack.c.h.b16 %v473
        %v726 = vunpack.c.l.b16 %v474
        %v727 = vunpack.c.h.b16 %v474
        %v728 = vunpack.c.l.b16 %v475
        %v729 = vunpack.c.h.b16 %v475
        %v730 = vunpack.c.l.b16 %v476
        %v731 = vunpack.c.h.b16 %v476
        %v732 = vunpack.c.l.b16 %v477
        %v733 = vunpack.c.h.b16 %v477
        %v734 = vunpack.c.l.b16 %v478
        %v735 = vunpack.c.h.b16 %v478
        %v736 = vunpack.c.l.b16 %v479
        %v737 = vunpack.c.h.b16 %v479
        %v738 = vunpack.c.l.b16 %v480
        %v739 = vunpack.c.h.b16 %v480
        %v740 = vunpack.c.l.b16 %v481
        %v741 = vunpack.c.h.b16 %v481
        %v742 = vunpack.c.l.b16 %v482
        %v743 = vunpack.c.h.b16 %v482
        %v744 = vunpack.c.l.b16 %v483
        %v745 = vunpack.c.h.b16 %v483
        %v746 = vunpack.c.l.b16 %v484
        %v747 = vunpack.c.h.b16 %v484
        %v748 = vunpack.c.l.b16 %v485
        %v749 = vunpack.c.h.b16 %v485
        %v750 = vunpack.c.l.b16 %v486
        %v751 = vunpack.c.h.b16 %v486
        %v752 = vunpack.c.l.b16 %v487
        %v753 = vunpack.c.h.b16 %v487
        %v754 = vunpack.c.l.b16 %v488
        %v755 = vunpack.c.h.b16 %v488
        %v756 = vunpack.c.l.b16 %v489
        %v757 = vunpack.c.h.b16 %v489
        %v758 = vunpack.c.l.b16 %v490
        %v759 = vunpack.c.h.b16 %v490
        %v760 = vunpack.c.l.b16 %v491
        %v761 = vunpack.c.h.b16 %v491
        %v762 = vunpack.c.l.b16 %v492
        %v763 = vunpack.c.h.b16 %v492
        %v764 = vunpack.c.l.b16 %v493
        %v765 = vunpack.c.h.b16 %v493
        %v766 = vunpack.c.l.b16 %v494
        %v767 = vunpack.c.h.b16 %v494
        %v768 = vunpack.c.l.b16 %v495
        %v769 = vunpack.c.h.b16 %v495
        %v770 = vunpack.c.l.b16 %v496
        %v771 = vunpack.c.h.b16 %v496
        %v772 = vunpack.c.l.b16 %v497
        %v773 = vunpack.c.h.b16 %v497
        %v774 = vunpack.c.l.b16 %v498
        %v775 = vunpack.c.h.b16 %v498
        %v776 = vunpack.c.l.b16 %v499
        %v777 = vunpack.c.h.b16 %v499
        %v778 = vunpack.c.l.b16 %v500
        %v779 = vunpack.c.h.b16 %v500
        %v780 = vunpack.c.l.b16 %v501
        %v781 = vunpack.c.h.b16 %v501
        %v782 = vunpack.c.l.b16 %v502
        %v783 = vunpack.c.h.b16 %v502
        %v784 = vunpack.c.l.b16 %v503
        %v785 = vunpack.c.h.b16 %v503
        %v786 = vunpack.c.l.b16 %v504
        %v787 = vunpack.c.h.b16 %v504
        %v788 = vunpack.c.l.b16 %v505
        %v789 = vunpack.c.h.b16 %v505
        %v790 = vunpack.c.l.b16 %v506
        %v791 = vunpack.c.h.b16 %v506
        %v792 = vunpack.c.l.b16 %v507
        %v793 = vunpack.c.h.b16 %v507
        %v794 = vunpack.c.l.b16 %v508
        %v795 = vunpack.c.h.b16 %v508
        %v796 = vunpack.c.l.b16 %v509
        %v797 = vunpack.c.h.b16 %v509
        %v798 = vunpack.c.l.b16 %v510
        %v799 = vunpack.c.h.b16 %v510
        %v800 = vunpack.c.l.b16 %v511
        %v801 = vunpack.c.h.b16 %v511
        %v802 = vunpack.c.l.b16 %v512
        %v803 = vunpack.c.h.b16 %v512
        %v804 = vunpack.c.l.b16 %v513
        %v805 = vunpack.c.h.b16 %v513
        %v806 = vunpack.c.l.b16 %v514
        %v807 = vunpack.c.h.b16 %v514
        %v808 = vunpack.c.l.b16 %v515
        %v809 = vunpack.c.h.b16 %v515
        %v810 = vunpack.c.l.b16 %v516
        %v811 = vunpack.c.h.b16 %v516
        %v812 = vunpack.c.l.b16 %v517
        %v813 = vunpack.c.h.b16 %v517
        %v814 = vunpack.c.l.b16 %v518
        %v815 = vunpack.c.h.b16 %v518
        %v816 = vunpack.c.l.b16 %v519
        %v817 = vunpack.c.h.b16 %v519
        %v818 = vunpack.c.l.b16 %v520
        %v819 = vunpack.c.h.b16 %v520
        %v820 = vunpack.c.l.b16 %v521
        %v821 = vunpack.c.h.b16 %v521
        %v822 = vpack.c.b16 %v632, %v630
        %v823 = vpack.c.b16 %v633, %v631
        %v824 = vpack.c.b16 %v636, %v634
        %v825 = vpack.c.b16 %v637, %v635
        %v826 = vpack.c.b16 %v640, %v638
        %v827 = vpack.c.b16 %v641, %v639
        %v828 = vpack.c.b16 %v644, %v642
        %v829 = vpack.c.b16 %v645, %v643
        %v830 = vpack.c.b16 %v648, %v646
        %v831 = vpack.c.b16 %v649, %v647
        %v832 = vpack.c.b16 %v652, %v650
        %v833 = vpack.c.b16 %v653, %v651
        %v834 = vpack.c.b16 %v656, %v654
        %v835 = vpack.c.b16 %v657, %v655
        %v836 = vpack.c.b16 %v660, %v658
        %v837 = vpack.c.b16 %v661, %v659
        %v838 = vpack.c.b16 %v664, %v662
        %v839 = vpack.c.b16 %v665, %v663
        %v840 = vpack.c.b16 %v668, %v666
        %v841 = vpack.c.b16 %v669, %v667
        %v842 = vpack.c.b16 %v672, %v670
        %v843 = vpack.c.b16 %v673, %v671
        %v844 = vpack.c.b16 %v676, %v674
        %v845 = vpack.c.b16 %v677, %v675
        %v846 = vpack.c.b16 %v680, %v678
        %v847 = vpack.c.b16 %v681, %v679
        %v848 = vpack.c.b16 %v684, %v682
        %v849 = vpack.c.b16 %v685, %v683
        %v850 = vpack.c.b16 %v688, %v686
        %v851 = vpack.c.b16 %v689, %v687
        %v852 = vpack.c.b16 %v692, %v690
        %v853 = vpack.c.b16 %v693, %v691
        %v854 = vpack.c.b16 %v696, %v694
        %v855 = vpack.c.b16 %v697, %v695
        %v856 = vpack.c.b16 %v700, %v698
        %v857 = vpack.c.b16 %v701, %v699
        %v858 = vpack.c.b16 %v704, %v702
        %v859 = vpack.c.b16 %v705, %v703
        %v860 = vpack.c.b16 %v708, %v706
        %v861 = vpack.c.b16 %v709, %v707
        %v862 = vpack.c.b16 %v712, %v710
        %v863 = vpack.c.b16 %v713, %v711
        %v864 = vpack.c.b16 %v716, %v714
        %v865 = vpack.c.b16 %v717, %v715
        %v866 = vpack.c.b16 %v720, %v718
        %v867 = vpack.c.b16 %v721, %v719
        %v868 = vpack.c.b16 %v724, %v722
        %v869 = vpack.c.b16 %v725, %v723
        %v870 = vpack.c.b16 %v728, %v726
        %v871 = vpack.c.b16 %v729, %v727
        %v872 = vpack.c.b16 %v732, %v730
        %v873 = vpack.c.b16 %v733, %v731
        %v874 = vpack.c.b16 %v736, %v734
        %v875 = vpack.c.b16 %v737, %v735
        %v876 = vpack.c.b16 %v740, %v738
        %v877 = vpack.c.b16 %v741, %v739
        %v878 = vpack.c.b16 %v744, %v742
        %v879 = vpack.c.b16 %v745, %v743
        %v880 = vpack.c.b16 %v748, %v746
        %v881 = vpack.c.b16 %v749, %v747
        %v882 = vpack.c.b16 %v752, %v750
        %v883 = vpack.c.b16 %v753, %v751
        %v884 = vpack.c.b16 %v756, %v754
        %v885 = vpack.c.b16 %v757, %v755
        %v886 = vpack.c.b16 %v760, %v758
        %v887 = vpack.c.b16 %v761, %v759
        %v888 = vpack.c.b16 %v764, %v762
        %v889 = vpack.c.b16 %v765, %v763
        %v890 = vpack.c.b16 %v768, %v766
        %v891 = vpack.c.b16 %v769, %v767
        %v892 = vpack.c.b16 %v772, %v770
        %v893 = vpack.c.b16 %v773, %v771
        %v894 = vpack.c.b16 %v776, %v774
        %v895 = vpack.c.b16 %v777, %v775
        %v896 = vpack.c.b16 %v780, %v778
        %v897 = vpack.c.b16 %v781, %v779
        %v898 = vpack.c.b16 %v784, %v782
        %v899 = vpack.c.b16 %v785, %v783
        %v900 = vpack.c.b16 %v788, %v786
        %v901 = vpack.c.b16 %v789, %v787
        %v902 = vpack.c.b16 %v792, %v790
        %v903 = vpack.c.b16 %v793, %v791
        %v904 = vpack.c.b16 %v796, %v794
        %v905 = vpack.c.b16 %v797, %v795
        %v906 = vpack.c.b16 %v800, %v798
        %v907 = vpack.c.b16 %v801, %v799
        %v908 = vpack.c.b16 %v804, %v802
        %v909 = vpack.c.b16 %v805, %v803
        %v910 = vpack.c.b16 %v808, %v806
        %v911 = vpack.c.b16 %v809, %v807
        %v912 = vpack.c.b16 %v812, %v810
        %v913 = vpack.c.b16 %v813, %v811
        %v914 = vpack.c.b16 %v816, %v814
        %v915 = vpack.c.b16 %v817, %v815
        %v916 = vpack.c.b16 %v820, %v818
        %v917 = vpack.c.b16 %v821, %v819
        %1014 = vmatprep.subr.bf16.mxu0 %v823
        %1015 = vmatpush1.bf16.msra.mxu0 %v822
        %1016 = vmatprep.subr.bf16.mxu0 %v825
        %1017 = vmatpush1.bf16.msra.mxu0 %v824
        %1018 = vmatprep.subr.bf16.mxu0 %v827
        %1019 = vmatpush1.bf16.msra.mxu0 %v826
        %1020 = vmatprep.subr.bf16.mxu0 %v829
        %1021 = vmatpush1.bf16.msra.mxu0 %v828
        %1022 = vmatprep.subr.bf16.mxu0 %v831
        %1023 = vmatpush1.bf16.msra.mxu0 %v830
        %1024 = vmatprep.subr.bf16.mxu0 %v833
        %1025 = vmatpush1.bf16.msra.mxu0 %v832
        %1026 = vmatprep.subr.bf16.mxu0 %v835
        %1027 = vmatpush1.bf16.msra.mxu0 %v834
        %1028 = vmatprep.subr.bf16.mxu0 %v837
        %1029 = vmatpush1.bf16.msra.mxu0 %v836
        %1030 = vmatprep.subr.bf16.mxu0 %v839
        %1031 = vmatpush1.bf16.msra.mxu0 %v838
        %1032 = vmatprep.subr.bf16.mxu0 %v841
        %1033 = vmatpush1.bf16.msra.mxu0 %v840
        %1034 = vmatprep.subr.bf16.mxu0 %v843
        %1035 = vmatpush1.bf16.msra.mxu0 %v842
        %1036 = vmatprep.subr.bf16.mxu0 %v845
        %1037 = vmatpush1.bf16.msra.mxu0 %v844
        %1038 = vmatprep.subr.bf16.mxu0 %v847
        %1039 = vmatpush1.bf16.msra.mxu0 %v846
        %1040 = vmatprep.subr.bf16.mxu0 %v849
        %1041 = vmatpush1.bf16.msra.mxu0 %v848
        %1042 = vmatprep.subr.bf16.mxu0 %v851
        %1043 = vmatpush1.bf16.msra.mxu0 %v850
        %1044 = vmatprep.subr.bf16.mxu0 %v853
        %1045 = vmatpush1.bf16.msra.mxu0 %v852
        %1046 = vmatprep.mubr.bf16.mxu0 %v421
        %1047 = vmatmul.mubr.bf16.gmra.mrb[0].mxu0 %v420
        %v1048 = vpop.f32.mrb[0].mxu0
        %v1049 = vadd.f32 %v527, %v1048
        %v1050 = vpop.f32.mrb[0].mxu0
        %v1051 = vadd.f32 %v531, %v1050
        %v1052 = vpop.f32.mrb[0].mxu0
        %v1053 = vadd.f32 %v527, %v1052
        %v1054 = vpop.f32.mrb[0].mxu0
        %v1055 = vadd.f32 %v531, %v1054
        %1056 = vdwg.mxu0
        %1057 = vmatprep.subr.bf16.mxu0 %v855
        %1058 = vmatpush1.bf16.msra.mxu0 %v854
        %1059 = vmatprep.subr.bf16.mxu0 %v857
        %1060 = vmatpush1.bf16.msra.mxu0 %v856
        %1061 = vmatprep.subr.bf16.mxu0 %v859
        %1062 = vmatpush1.bf16.msra.mxu0 %v858
        %1063 = vmatprep.subr.bf16.mxu0 %v861
        %1064 = vmatpush1.bf16.msra.mxu0 %v860
        %1065 = vmatprep.subr.bf16.mxu0 %v863
        %1066 = vmatpush1.bf16.msra.mxu0 %v862
        %1067 = vmatprep.subr.bf16.mxu0 %v865
        %1068 = vmatpush1.bf16.msra.mxu0 %v864
        %1069 = vmatprep.subr.bf16.mxu0 %v867
        %1070 = vmatpush1.bf16.msra.mxu0 %v866
        %1071 = vmatprep.subr.bf16.mxu0 %v869
        %1072 = vmatpush1.bf16.msra.mxu0 %v868
        %1073 = vmatprep.subr.bf16.mxu0 %v871
        %1074 = vmatpush1.bf16.msra.mxu0 %v870
        %1075 = vmatprep.subr.bf16.mxu0 %v873
        %1076 = vmatpush1.bf16.msra.mxu0 %v872
        %1077 = vmatprep.subr.bf16.mxu0 %v875
        %1078 = vmatpush1.bf16.msra.mxu0 %v874
        %1079 = vmatprep.subr.bf16.mxu0 %v877
        %1080 = vmatpush1.bf16.msra.mxu0 %v876
        %1081 = vmatprep.subr.bf16.mxu0 %v879
        %1082 = vmatpush1.bf16.msra.mxu0 %v878
        %1083 = vmatprep.subr.bf16.mxu0 %v881
        %1084 = vmatpush1.bf16.msra.mxu0 %v880
        %1085 = vmatprep.subr.bf16.mxu0 %v883
        %1086 = vmatpush1.bf16.msra.mxu0 %v882
        %1087 = vmatprep.subr.bf16.mxu0 %v885
        %1088 = vmatpush1.bf16.msra.mxu0 %v884
        %1089 = vmatprep.mubr.bf16.mxu0 %v423
        %1090 = vmatmul.mubr.bf16.gmra.mrb[0].mxu0 %v422
        %v1091 = vpop.f32.mrb[0].mxu0
        %v1092 = vadd.f32 %v1049, %v1091
        %v1093 = vpop.f32.mrb[0].mxu0
        %v1094 = vadd.f32 %v1051, %v1093
        %v1095 = vpop.f32.mrb[0].mxu0
        %v1096 = vadd.f32 %v1053, %v1095
        %v1097 = vpop.f32.mrb[0].mxu0
        %v1098 = vadd.f32 %v1055, %v1097
        %1099 = vdwg.mxu0
        %1100 = vmatprep.subr.bf16.mxu0 %v887
        %1101 = vmatpush1.bf16.msra.mxu0 %v886
        %1102 = vmatprep.subr.bf16.mxu0 %v889
        %1103 = vmatpush1.bf16.msra.mxu0 %v888
        %1104 = vmatprep.subr.bf16.mxu0 %v891
        %1105 = vmatpush1.bf16.msra.mxu0 %v890
        %1106 = vmatprep.subr.bf16.mxu0 %v893
        %1107 = vmatpush1.bf16.msra.mxu0 %v892
        %1108 = vmatprep.subr.bf16.mxu0 %v895
        %1109 = vmatpush1.bf16.msra.mxu0 %v894
        %1110 = vmatprep.subr.bf16.mxu0 %v897
        %1111 = vmatpush1.bf16.msra.mxu0 %v896
        %1112 = vmatprep.subr.bf16.mxu0 %v899
        %1113 = vmatpush1.bf16.msra.mxu0 %v898
        %1114 = vmatprep.subr.bf16.mxu0 %v901
        %1115 = vmatpush1.bf16.msra.mxu0 %v900
        %1116 = vmatprep.subr.bf16.mxu0 %v903
        %1117 = vmatpush1.bf16.msra.mxu0 %v902
        %1118 = vmatprep.subr.bf16.mxu0 %v905
        %1119 = vmatpush1.bf16.msra.mxu0 %v904
        %1120 = vmatprep.subr.bf16.mxu0 %v907
        %1121 = vmatpush1.bf16.msra.mxu0 %v906
        %1122 = vmatprep.subr.bf16.mxu0 %v909
        %1123 = vmatpush1.bf16.msra.mxu0 %v908
        %1124 = vmatprep.subr.bf16.mxu0 %v911
        %1125 = vmatpush1.bf16.msra.mxu0 %v910
        %1126 = vmatprep.subr.bf16.mxu0 %v913
        %1127 = vmatpush1.bf16.msra.mxu0 %v912
        %1128 = vmatprep.subr.bf16.mxu0 %v915
        %1129 = vmatpush1.bf16.msra.mxu0 %v914
        %1130 = vmatprep.subr.bf16.mxu0 %v917
        %1131 = vmatpush1.bf16.msra.mxu0 %v916
        %1132 = vmatprep.mubr.bf16.mxu0 %v425
        %1133 = vmatmul.mubr.bf16.gmra.mrb[0].mxu0 %v424
        %v1134 = vpop.f32.mrb[0].mxu0
        %v1135 = vadd.f32 %v1092, %v1134
        %v1136 = vpop.f32.mrb[0].mxu0
        %v1137 = vadd.f32 %v1094, %v1136
        %v1138 = vpop.f32.mrb[0].mxu0
        %v1139 = vadd.f32 %v1096, %v1138
        %v1140 = vpop.f32.mrb[0].mxu0
        %v1141 = vadd.f32 %v1098, %v1140
        %1142 = vdwg.mxu0
        %v1143 = vmax.f32 %v1135, 0.0
        %v1144 = vmax.f32 %v1137, 0.0
        %v1145 = vmax.f32 %v1139, 0.0
        %v1146 = vmax.f32 %v1141, 0.0
        %v1151 = vrot.slane %v1143, 7
        %v1152 = vrot.slane %v1144, 7
        %v1153 = vrot.slane %v1145, 7
        %v1154 = vsel %vm369, %v1151, %v1153
        %v1155 = vrot.slane %v1146, 7
        %v1156 = vsel %vm369, %v1152, %v1155
        %v1163 = vsel %vm369, 0.0, %v1151
        %v1164 = vsel %vm369, 0.0, %v1152
        %v1165 = vsel %vm369, %v1153, 0.0
        %v1166 = vsel %vm369, %v1155, 0.0
        %v1171 = vrot.slane %v1163, 1
        %v1172 = vrot.slane %v1154, 1
        %v1173 = vsel %vm390, %v1171, %v1172
        %v1174 = vrot.slane %v1164, 1
        %v1175 = vrot.slane %v1156, 1
        %v1176 = vsel %vm390, %v1174, %v1175
        %v1177 = vrot.slane %v1165, 1
        %v1178 = vsel %vm390, %v1172, %v1177
        %v1179 = vrot.slane %v1166, 1
        %v1180 = vsel %vm390, %v1175, %v1179
        %v1185 = vrot.slane %v1163, 2
        %v1186 = vrot.slane %v1154, 2
        %v1187 = vsel %vm405, %v1185, %v1186
        %v1188 = vrot.slane %v1164, 2
        %v1189 = vrot.slane %v1156, 2
        %v1190 = vsel %vm405, %v1188, %v1189
        %v1191 = vrot.slane %v1165, 2
        %v1192 = vsel %vm405, %v1186, %v1191
        %v1193 = vrot.slane %v1166, 2
        %v1194 = vsel %vm405, %v1189, %v1193
        %v1199 = vpack.c.bf16 %v1154, %v1163
        %v1200 = vpack.c.bf16 %v1156, %v1164
        %v1201 = vpack.c.bf16 %v1178, %v1173
        %v1202 = vpack.c.bf16 %v1180, %v1176
        %v1203 = vpack.c.bf16 %v1192, %v1187
        %v1204 = vpack.c.bf16 %v1194, %v1190
        %v1205 = vld [vmem:[#allocation5] sm:$0xff]
        %v1206 = vld [vmem:[#allocation5 + $0x8] sm:$0xff]
        %v1207 = vld [vmem:[#allocation5 + $0x10] sm:$0xff]
        %v1208 = vld [vmem:[#allocation5 + $0x18] sm:$0xff]
        %v1209 = vld [vmem:[#allocation5 + $0x20] sm:$0xff]
        %v1210 = vld [vmem:[#allocation5 + $0x28] sm:$0xff]
        %v1211 = vld [vmem:[#allocation5 + $0x30] sm:$0xff]
        %v1212 = vld [vmem:[#allocation5 + $0x38] sm:$0xff]
        %v1213 = vld [vmem:[#allocation5 + $0x40] sm:$0xff]
        %v1214 = vld [vmem:[#allocation5 + $0x48] sm:$0xff]
        %v1215 = vld [vmem:[#allocation5 + $0x50] sm:$0xff]
        %v1216 = vld [vmem:[#allocation5 + $0x58] sm:$0xff]
        %v1217 = vld [vmem:[#allocation5 + $0x60] sm:$0xff]
        %v1218 = vld [vmem:[#allocation5 + $0x68] sm:$0xff]
        %v1219 = vld [vmem:[#allocation5 + $0x70] sm:$0xff]
        %v1220 = vld [vmem:[#allocation5 + $0x78] sm:$0xff]
        %v1221 = vld [vmem:[#allocation5 + $0x80] sm:$0xff]
        %v1222 = vld [vmem:[#allocation5 + $0x88] sm:$0xff]
        %v1223 = vld [vmem:[#allocation5 + $0x90] sm:$0xff]
        %v1224 = vld [vmem:[#allocation5 + $0x98] sm:$0xff]
        %v1225 = vld [vmem:[#allocation5 + $0xa0] sm:$0xff]
        %v1226 = vld [vmem:[#allocation5 + $0xa8] sm:$0xff]
        %v1227 = vld [vmem:[#allocation5 + $0xb0] sm:$0xff]
        %v1228 = vld [vmem:[#allocation5 + $0xb8] sm:$0xff]
        %v1229 = vld [vmem:[#allocation5 + $0xc0] sm:$0xff]
        %v1230 = vld [vmem:[#allocation5 + $0xc8] sm:$0xff]
        %v1231 = vld [vmem:[#allocation5 + $0xd0] sm:$0xff]
        %v1232 = vld [vmem:[#allocation5 + $0xd8] sm:$0xff]
        %v1233 = vld [vmem:[#allocation5 + $0xe0] sm:$0xff]
        %v1234 = vld [vmem:[#allocation5 + $0xe8] sm:$0xff]
        %v1235 = vld [vmem:[#allocation5 + $0xf0] sm:$0xff]
        %v1236 = vld [vmem:[#allocation5 + $0xf8] sm:$0xff]
        %v1237 = vld [vmem:[#allocation5 + $0x100] sm:$0xff]
        %v1238 = vld [vmem:[#allocation5 + $0x108] sm:$0xff]
        %v1239 = vld [vmem:[#allocation5 + $0x110] sm:$0xff]
        %v1240 = vld [vmem:[#allocation5 + $0x118] sm:$0xff]
        %v1241 = vld [vmem:[#allocation5 + $0x120] sm:$0xff]
        %v1242 = vld [vmem:[#allocation5 + $0x128] sm:$0xff]
        %v1243 = vld [vmem:[#allocation5 + $0x130] sm:$0xff]
        %v1244 = vld [vmem:[#allocation5 + $0x138] sm:$0xff]
        %v1245 = vld [vmem:[#allocation5 + $0x140] sm:$0xff]
        %v1246 = vld [vmem:[#allocation5 + $0x148] sm:$0xff]
        %v1247 = vld [vmem:[#allocation5 + $0x150] sm:$0xff]
        %v1248 = vld [vmem:[#allocation5 + $0x158] sm:$0xff]
        %v1249 = vld [vmem:[#allocation5 + $0x160] sm:$0xff]
        %v1250 = vld [vmem:[#allocation5 + $0x168] sm:$0xff]
        %v1251 = vld [vmem:[#allocation5 + $0x170] sm:$0xff]
        %v1252 = vld [vmem:[#allocation5 + $0x178] sm:$0xff]
        %v1253 = vld [vmem:[#allocation5 + $0x180] sm:$0xff]
        %v1254 = vld [vmem:[#allocation5 + $0x188] sm:$0xff]
        %v1255 = vld [vmem:[#allocation5 + $0x190] sm:$0xff]
        %v1256 = vld [vmem:[#allocation5 + $0x198] sm:$0xff]
        %v1257 = vld [vmem:[#allocation5 + $0x1a0] sm:$0xff]
        %v1258 = vld [vmem:[#allocation5 + $0x1a8] sm:$0xff]
        %v1259 = vld [vmem:[#allocation5 + $0x1b0] sm:$0xff]
        %v1260 = vld [vmem:[#allocation5 + $0x1b8] sm:$0xff]
        %v1261 = vld [vmem:[#allocation5 + $0x1c0] sm:$0xff]
        %v1262 = vld [vmem:[#allocation5 + $0x1c8] sm:$0xff]
        %v1263 = vld [vmem:[#allocation5 + $0x1d0] sm:$0xff]
        %v1264 = vld [vmem:[#allocation5 + $0x1d8] sm:$0xff]
        %v1265 = vld [vmem:[#allocation5 + $0x1e0] sm:$0xff]
        %v1266 = vld [vmem:[#allocation5 + $0x1e8] sm:$0xff]
        %v1267 = vld [vmem:[#allocation5 + $0x1f0] sm:$0xff]
        %v1268 = vld [vmem:[#allocation5 + $0x1f8] sm:$0xff]
        %v1269 = vld [vmem:[#allocation5 + $0x200] sm:$0xff]
        %v1270 = vld [vmem:[#allocation5 + $0x208] sm:$0xff]
        %v1271 = vld [vmem:[#allocation5 + $0x210] sm:$0xff]
        %v1272 = vld [vmem:[#allocation5 + $0x218] sm:$0xff]
        %v1273 = vld [vmem:[#allocation5 + $0x220] sm:$0xff]
        %v1274 = vld [vmem:[#allocation5 + $0x228] sm:$0xff]
        %v1275 = vld [vmem:[#allocation5 + $0x230] sm:$0xff]
        %v1276 = vld [vmem:[#allocation5 + $0x238] sm:$0xff]
        %v1277 = vld [vmem:[#allocation5 + $0x240] sm:$0xff]
        %v1278 = vld [vmem:[#allocation5 + $0x248] sm:$0xff]
        %v1279 = vld [vmem:[#allocation5 + $0x250] sm:$0xff]
        %v1280 = vld [vmem:[#allocation5 + $0x258] sm:$0xff]
        %v1281 = vld [vmem:[#allocation5 + $0x260] sm:$0xff]
        %v1282 = vld [vmem:[#allocation5 + $0x268] sm:$0xff]
        %v1283 = vld [vmem:[#allocation5 + $0x270] sm:$0xff]
        %v1284 = vld [vmem:[#allocation5 + $0x278] sm:$0xff]
        %v1285 = vld [vmem:[#allocation5 + $0x280] sm:$0xff]
        %v1286 = vld [vmem:[#allocation5 + $0x288] sm:$0xff]
        %v1287 = vld [vmem:[#allocation5 + $0x290] sm:$0xff]
        %v1288 = vld [vmem:[#allocation5 + $0x298] sm:$0xff]
        %v1289 = vld [vmem:[#allocation5 + $0x2a0] sm:$0xff]
        %v1290 = vld [vmem:[#allocation5 + $0x2a8] sm:$0xff]
        %v1291 = vld [vmem:[#allocation5 + $0x2b0] sm:$0xff]
        %v1292 = vld [vmem:[#allocation5 + $0x2b8] sm:$0xff]
        %v1293 = vld [vmem:[#allocation5 + $0x2c0] sm:$0xff]
        %v1294 = vld [vmem:[#allocation5 + $0x2c8] sm:$0xff]
        %v1295 = vld [vmem:[#allocation5 + $0x2d0] sm:$0xff]
        %v1296 = vld [vmem:[#allocation5 + $0x2d8] sm:$0xff]
        %v1297 = vld [vmem:[#allocation5 + $0x2e0] sm:$0xff]
        %v1298 = vld [vmem:[#allocation5 + $0x2e8] sm:$0xff]
        %v1299 = vld [vmem:[#allocation5 + $0x2f0] sm:$0xff]
        %v1300 = vld [vmem:[#allocation5 + $0x2f8] sm:$0xff]
        %v1301 = vld [vmem:[%s4] sm:$0x3]
        %v1303 = vlaneseq
        %v1304 = vshrl.u32 %v1303, 7
        %v1305 = vsub.s32 0, %v1304
        %v1306 = vrot.slane %v1301, %v1305
        %v1307 = vlaneseq
        %v1308 = vshrl.u32 %v1307, 7
        %v1309 = vsub.s32 1, %v1308
        %v1310 = vrot.slane %v1301, %v1309
        %v1409 = vunpack.c.l.b16 %v1205
        %v1410 = vunpack.c.h.b16 %v1205
        %v1411 = vunpack.c.l.b16 %v1206
        %v1412 = vunpack.c.h.b16 %v1206
        %v1413 = vunpack.c.l.b16 %v1207
        %v1414 = vunpack.c.h.b16 %v1207
        %v1415 = vunpack.c.l.b16 %v1208
        %v1416 = vunpack.c.h.b16 %v1208
        %v1417 = vunpack.c.l.b16 %v1209
        %v1418 = vunpack.c.h.b16 %v1209
        %v1419 = vunpack.c.l.b16 %v1210
        %v1420 = vunpack.c.h.b16 %v1210
        %v1421 = vunpack.c.l.b16 %v1211
        %v1422 = vunpack.c.h.b16 %v1211
        %v1423 = vunpack.c.l.b16 %v1212
        %v1424 = vunpack.c.h.b16 %v1212
        %v1425 = vunpack.c.l.b16 %v1213
        %v1426 = vunpack.c.h.b16 %v1213
        %v1427 = vunpack.c.l.b16 %v1214
        %v1428 = vunpack.c.h.b16 %v1214
        %v1429 = vunpack.c.l.b16 %v1215
        %v1430 = vunpack.c.h.b16 %v1215
        %v1431 = vunpack.c.l.b16 %v1216
        %v1432 = vunpack.c.h.b16 %v1216
        %v1433 = vunpack.c.l.b16 %v1217
        %v1434 = vunpack.c.h.b16 %v1217
        %v1435 = vunpack.c.l.b16 %v1218
        %v1436 = vunpack.c.h.b16 %v1218
        %v1437 = vunpack.c.l.b16 %v1219
        %v1438 = vunpack.c.h.b16 %v1219
        %v1439 = vunpack.c.l.b16 %v1220
        %v1440 = vunpack.c.h.b16 %v1220
        %v1441 = vunpack.c.l.b16 %v1221
        %v1442 = vunpack.c.h.b16 %v1221
        %v1443 = vunpack.c.l.b16 %v1222
        %v1444 = vunpack.c.h.b16 %v1222
        %v1445 = vunpack.c.l.b16 %v1223
        %v1446 = vunpack.c.h.b16 %v1223
        %v1447 = vunpack.c.l.b16 %v1224
        %v1448 = vunpack.c.h.b16 %v1224
        %v1449 = vunpack.c.l.b16 %v1225
        %v1450 = vunpack.c.h.b16 %v1225
        %v1451 = vunpack.c.l.b16 %v1226
        %v1452 = vunpack.c.h.b16 %v1226
        %v1453 = vunpack.c.l.b16 %v1227
        %v1454 = vunpack.c.h.b16 %v1227
        %v1455 = vunpack.c.l.b16 %v1228
        %v1456 = vunpack.c.h.b16 %v1228
        %v1457 = vunpack.c.l.b16 %v1229
        %v1458 = vunpack.c.h.b16 %v1229
        %v1459 = vunpack.c.l.b16 %v1230
        %v1460 = vunpack.c.h.b16 %v1230
        %v1461 = vunpack.c.l.b16 %v1231
        %v1462 = vunpack.c.h.b16 %v1231
        %v1463 = vunpack.c.l.b16 %v1232
        %v1464 = vunpack.c.h.b16 %v1232
        %v1465 = vunpack.c.l.b16 %v1233
        %v1466 = vunpack.c.h.b16 %v1233
        %v1467 = vunpack.c.l.b16 %v1234
        %v1468 = vunpack.c.h.b16 %v1234
        %v1469 = vunpack.c.l.b16 %v1235
        %v1470 = vunpack.c.h.b16 %v1235
        %v1471 = vunpack.c.l.b16 %v1236
        %v1472 = vunpack.c.h.b16 %v1236
        %v1473 = vunpack.c.l.b16 %v1237
        %v1474 = vunpack.c.h.b16 %v1237
        %v1475 = vunpack.c.l.b16 %v1238
        %v1476 = vunpack.c.h.b16 %v1238
        %v1477 = vunpack.c.l.b16 %v1239
        %v1478 = vunpack.c.h.b16 %v1239
        %v1479 = vunpack.c.l.b16 %v1240
        %v1480 = vunpack.c.h.b16 %v1240
        %v1481 = vunpack.c.l.b16 %v1241
        %v1482 = vunpack.c.h.b16 %v1241
        %v1483 = vunpack.c.l.b16 %v1242
        %v1484 = vunpack.c.h.b16 %v1242
        %v1485 = vunpack.c.l.b16 %v1243
        %v1486 = vunpack.c.h.b16 %v1243
        %v1487 = vunpack.c.l.b16 %v1244
        %v1488 = vunpack.c.h.b16 %v1244
        %v1489 = vunpack.c.l.b16 %v1245
        %v1490 = vunpack.c.h.b16 %v1245
        %v1491 = vunpack.c.l.b16 %v1246
        %v1492 = vunpack.c.h.b16 %v1246
        %v1493 = vunpack.c.l.b16 %v1247
        %v1494 = vunpack.c.h.b16 %v1247
        %v1495 = vunpack.c.l.b16 %v1248
        %v1496 = vunpack.c.h.b16 %v1248
        %v1497 = vunpack.c.l.b16 %v1249
        %v1498 = vunpack.c.h.b16 %v1249
        %v1499 = vunpack.c.l.b16 %v1250
        %v1500 = vunpack.c.h.b16 %v1250
        %v1501 = vunpack.c.l.b16 %v1251
        %v1502 = vunpack.c.h.b16 %v1251
        %v1503 = vunpack.c.l.b16 %v1252
        %v1504 = vunpack.c.h.b16 %v1252
        %v1505 = vunpack.c.l.b16 %v1253
        %v1506 = vunpack.c.h.b16 %v1253
        %v1507 = vunpack.c.l.b16 %v1254
        %v1508 = vunpack.c.h.b16 %v1254
        %v1509 = vunpack.c.l.b16 %v1255
        %v1510 = vunpack.c.h.b16 %v1255
        %v1511 = vunpack.c.l.b16 %v1256
        %v1512 = vunpack.c.h.b16 %v1256
        %v1513 = vunpack.c.l.b16 %v1257
        %v1514 = vunpack.c.h.b16 %v1257
        %v1515 = vunpack.c.l.b16 %v1258
        %v1516 = vunpack.c.h.b16 %v1258
        %v1517 = vunpack.c.l.b16 %v1259
        %v1518 = vunpack.c.h.b16 %v1259
        %v1519 = vunpack.c.l.b16 %v1260
        %v1520 = vunpack.c.h.b16 %v1260
        %v1521 = vunpack.c.l.b16 %v1261
        %v1522 = vunpack.c.h.b16 %v1261
        %v1523 = vunpack.c.l.b16 %v1262
        %v1524 = vunpack.c.h.b16 %v1262
        %v1525 = vunpack.c.l.b16 %v1263
        %v1526 = vunpack.c.h.b16 %v1263
        %v1527 = vunpack.c.l.b16 %v1264
        %v1528 = vunpack.c.h.b16 %v1264
        %v1529 = vunpack.c.l.b16 %v1265
        %v1530 = vunpack.c.h.b16 %v1265
        %v1531 = vunpack.c.l.b16 %v1266
        %v1532 = vunpack.c.h.b16 %v1266
        %v1533 = vunpack.c.l.b16 %v1267
        %v1534 = vunpack.c.h.b16 %v1267
        %v1535 = vunpack.c.l.b16 %v1268
        %v1536 = vunpack.c.h.b16 %v1268
        %v1537 = vunpack.c.l.b16 %v1269
        %v1538 = vunpack.c.h.b16 %v1269
        %v1539 = vunpack.c.l.b16 %v1270
        %v1540 = vunpack.c.h.b16 %v1270
        %v1541 = vunpack.c.l.b16 %v1271
        %v1542 = vunpack.c.h.b16 %v1271
        %v1543 = vunpack.c.l.b16 %v1272
        %v1544 = vunpack.c.h.b16 %v1272
        %v1545 = vunpack.c.l.b16 %v1273
        %v1546 = vunpack.c.h.b16 %v1273
        %v1547 = vunpack.c.l.b16 %v1274
        %v1548 = vunpack.c.h.b16 %v1274
        %v1549 = vunpack.c.l.b16 %v1275
        %v1550 = vunpack.c.h.b16 %v1275
        %v1551 = vunpack.c.l.b16 %v1276
        %v1552 = vunpack.c.h.b16 %v1276
        %v1553 = vunpack.c.l.b16 %v1277
        %v1554 = vunpack.c.h.b16 %v1277
        %v1555 = vunpack.c.l.b16 %v1278
        %v1556 = vunpack.c.h.b16 %v1278
        %v1557 = vunpack.c.l.b16 %v1279
        %v1558 = vunpack.c.h.b16 %v1279
        %v1559 = vunpack.c.l.b16 %v1280
        %v1560 = vunpack.c.h.b16 %v1280
        %v1561 = vunpack.c.l.b16 %v1281
        %v1562 = vunpack.c.h.b16 %v1281
        %v1563 = vunpack.c.l.b16 %v1282
        %v1564 = vunpack.c.h.b16 %v1282
        %v1565 = vunpack.c.l.b16 %v1283
        %v1566 = vunpack.c.h.b16 %v1283
        %v1567 = vunpack.c.l.b16 %v1284
        %v1568 = vunpack.c.h.b16 %v1284
        %v1569 = vunpack.c.l.b16 %v1285
        %v1570 = vunpack.c.h.b16 %v1285
        %v1571 = vunpack.c.l.b16 %v1286
        %v1572 = vunpack.c.h.b16 %v1286
        %v1573 = vunpack.c.l.b16 %v1287
        %v1574 = vunpack.c.h.b16 %v1287
        %v1575 = vunpack.c.l.b16 %v1288
        %v1576 = vunpack.c.h.b16 %v1288
        %v1577 = vunpack.c.l.b16 %v1289
        %v1578 = vunpack.c.h.b16 %v1289
        %v1579 = vunpack.c.l.b16 %v1290
        %v1580 = vunpack.c.h.b16 %v1290
        %v1581 = vunpack.c.l.b16 %v1291
        %v1582 = vunpack.c.h.b16 %v1291
        %v1583 = vunpack.c.l.b16 %v1292
        %v1584 = vunpack.c.h.b16 %v1292
        %v1585 = vunpack.c.l.b16 %v1293
        %v1586 = vunpack.c.h.b16 %v1293
        %v1587 = vunpack.c.l.b16 %v1294
        %v1588 = vunpack.c.h.b16 %v1294
        %v1589 = vunpack.c.l.b16 %v1295
        %v1590 = vunpack.c.h.b16 %v1295
        %v1591 = vunpack.c.l.b16 %v1296
        %v1592 = vunpack.c.h.b16 %v1296
        %v1593 = vunpack.c.l.b16 %v1297
        %v1594 = vunpack.c.h.b16 %v1297
        %v1595 = vunpack.c.l.b16 %v1298
        %v1596 = vunpack.c.h.b16 %v1298
        %v1597 = vunpack.c.l.b16 %v1299
        %v1598 = vunpack.c.h.b16 %v1299
        %v1599 = vunpack.c.l.b16 %v1300
        %v1600 = vunpack.c.h.b16 %v1300
        %v1601 = vpack.c.b16 %v1411, %v1409
        %v1602 = vpack.c.b16 %v1412, %v1410
        %v1603 = vpack.c.b16 %v1415, %v1413
        %v1604 = vpack.c.b16 %v1416, %v1414
        %v1605 = vpack.c.b16 %v1419, %v1417
        %v1606 = vpack.c.b16 %v1420, %v1418
        %v1607 = vpack.c.b16 %v1423, %v1421
        %v1608 = vpack.c.b16 %v1424, %v1422
        %v1609 = vpack.c.b16 %v1427, %v1425
        %v1610 = vpack.c.b16 %v1428, %v1426
        %v1611 = vpack.c.b16 %v1431, %v1429
        %v1612 = vpack.c.b16 %v1432, %v1430
        %v1613 = vpack.c.b16 %v1435, %v1433
        %v1614 = vpack.c.b16 %v1436, %v1434
        %v1615 = vpack.c.b16 %v1439, %v1437
        %v1616 = vpack.c.b16 %v1440, %v1438
        %v1617 = vpack.c.b16 %v1443, %v1441
        %v1618 = vpack.c.b16 %v1444, %v1442
        %v1619 = vpack.c.b16 %v1447, %v1445
        %v1620 = vpack.c.b16 %v1448, %v1446
        %v1621 = vpack.c.b16 %v1451, %v1449
        %v1622 = vpack.c.b16 %v1452, %v1450
        %v1623 = vpack.c.b16 %v1455, %v1453
        %v1624 = vpack.c.b16 %v1456, %v1454
        %v1625 = vpack.c.b16 %v1459, %v1457
        %v1626 = vpack.c.b16 %v1460, %v1458
        %v1627 = vpack.c.b16 %v1463, %v1461
        %v1628 = vpack.c.b16 %v1464, %v1462
        %v1629 = vpack.c.b16 %v1467, %v1465
        %v1630 = vpack.c.b16 %v1468, %v1466
        %v1631 = vpack.c.b16 %v1471, %v1469
        %v1632 = vpack.c.b16 %v1472, %v1470
        %v1633 = vpack.c.b16 %v1475, %v1473
        %v1634 = vpack.c.b16 %v1476, %v1474
        %v1635 = vpack.c.b16 %v1479, %v1477
        %v1636 = vpack.c.b16 %v1480, %v1478
        %v1637 = vpack.c.b16 %v1483, %v1481
        %v1638 = vpack.c.b16 %v1484, %v1482
        %v1639 = vpack.c.b16 %v1487, %v1485
        %v1640 = vpack.c.b16 %v1488, %v1486
        %v1641 = vpack.c.b16 %v1491, %v1489
        %v1642 = vpack.c.b16 %v1492, %v1490
        %v1643 = vpack.c.b16 %v1495, %v1493
        %v1644 = vpack.c.b16 %v1496, %v1494
        %v1645 = vpack.c.b16 %v1499, %v1497
        %v1646 = vpack.c.b16 %v1500, %v1498
        %v1647 = vpack.c.b16 %v1503, %v1501
        %v1648 = vpack.c.b16 %v1504, %v1502
        %v1649 = vpack.c.b16 %v1507, %v1505
        %v1650 = vpack.c.b16 %v1508, %v1506
        %v1651 = vpack.c.b16 %v1511, %v1509
        %v1652 = vpack.c.b16 %v1512, %v1510
        %v1653 = vpack.c.b16 %v1515, %v1513
        %v1654 = vpack.c.b16 %v1516, %v1514
        %v1655 = vpack.c.b16 %v1519, %v1517
        %v1656 = vpack.c.b16 %v1520, %v1518
        %v1657 = vpack.c.b16 %v1523, %v1521
        %v1658 = vpack.c.b16 %v1524, %v1522
        %v1659 = vpack.c.b16 %v1527, %v1525
        %v1660 = vpack.c.b16 %v1528, %v1526
        %v1661 = vpack.c.b16 %v1531, %v1529
        %v1662 = vpack.c.b16 %v1532, %v1530
        %v1663 = vpack.c.b16 %v1535, %v1533
        %v1664 = vpack.c.b16 %v1536, %v1534
        %v1665 = vpack.c.b16 %v1539, %v1537
        %v1666 = vpack.c.b16 %v1540, %v1538
        %v1667 = vpack.c.b16 %v1543, %v1541
        %v1668 = vpack.c.b16 %v1544, %v1542
        %v1669 = vpack.c.b16 %v1547, %v1545
        %v1670 = vpack.c.b16 %v1548, %v1546
        %v1671 = vpack.c.b16 %v1551, %v1549
        %v1672 = vpack.c.b16 %v1552, %v1550
        %v1673 = vpack.c.b16 %v1555, %v1553
        %v1674 = vpack.c.b16 %v1556, %v1554
        %v1675 = vpack.c.b16 %v1559, %v1557
        %v1676 = vpack.c.b16 %v1560, %v1558
        %v1677 = vpack.c.b16 %v1563, %v1561
        %v1678 = vpack.c.b16 %v1564, %v1562
        %v1679 = vpack.c.b16 %v1567, %v1565
        %v1680 = vpack.c.b16 %v1568, %v1566
        %v1681 = vpack.c.b16 %v1571, %v1569
        %v1682 = vpack.c.b16 %v1572, %v1570
        %v1683 = vpack.c.b16 %v1575, %v1573
        %v1684 = vpack.c.b16 %v1576, %v1574
        %v1685 = vpack.c.b16 %v1579, %v1577
        %v1686 = vpack.c.b16 %v1580, %v1578
        %v1687 = vpack.c.b16 %v1583, %v1581
        %v1688 = vpack.c.b16 %v1584, %v1582
        %v1689 = vpack.c.b16 %v1587, %v1585
        %v1690 = vpack.c.b16 %v1588, %v1586
        %v1691 = vpack.c.b16 %v1591, %v1589
        %v1692 = vpack.c.b16 %v1592, %v1590
        %v1693 = vpack.c.b16 %v1595, %v1593
        %v1694 = vpack.c.b16 %v1596, %v1594
        %v1695 = vpack.c.b16 %v1599, %v1597
        %v1696 = vpack.c.b16 %v1600, %v1598
        %1793 = vmatprep.subr.bf16.mxu0 %v1602
        %1794 = vmatpush1.bf16.msra.mxu0 %v1601
        %1795 = vmatprep.subr.bf16.mxu0 %v1604
        %1796 = vmatpush1.bf16.msra.mxu0 %v1603
        %1797 = vmatprep.subr.bf16.mxu0 %v1606
        %1798 = vmatpush1.bf16.msra.mxu0 %v1605
        %1799 = vmatprep.subr.bf16.mxu0 %v1608
        %1800 = vmatpush1.bf16.msra.mxu0 %v1607
        %1801 = vmatprep.subr.bf16.mxu0 %v1610
        %1802 = vmatpush1.bf16.msra.mxu0 %v1609
        %1803 = vmatprep.subr.bf16.mxu0 %v1612
        %1804 = vmatpush1.bf16.msra.mxu0 %v1611
        %1805 = vmatprep.subr.bf16.mxu0 %v1614
        %1806 = vmatpush1.bf16.msra.mxu0 %v1613
        %1807 = vmatprep.subr.bf16.mxu0 %v1616
        %1808 = vmatpush1.bf16.msra.mxu0 %v1615
        %1809 = vmatprep.subr.bf16.mxu0 %v1618
        %1810 = vmatpush1.bf16.msra.mxu0 %v1617
        %1811 = vmatprep.subr.bf16.mxu0 %v1620
        %1812 = vmatpush1.bf16.msra.mxu0 %v1619
        %1813 = vmatprep.subr.bf16.mxu0 %v1622
        %1814 = vmatpush1.bf16.msra.mxu0 %v1621
        %1815 = vmatprep.subr.bf16.mxu0 %v1624
        %1816 = vmatpush1.bf16.msra.mxu0 %v1623
        %1817 = vmatprep.subr.bf16.mxu0 %v1626
        %1818 = vmatpush1.bf16.msra.mxu0 %v1625
        %1819 = vmatprep.subr.bf16.mxu0 %v1628
        %1820 = vmatpush1.bf16.msra.mxu0 %v1627
        %1821 = vmatprep.subr.bf16.mxu0 %v1630
        %1822 = vmatpush1.bf16.msra.mxu0 %v1629
        %1823 = vmatprep.subr.bf16.mxu0 %v1632
        %1824 = vmatpush1.bf16.msra.mxu0 %v1631
        %1825 = vmatprep.mubr.bf16.mxu0 %v1200
        %1826 = vmatmul.mubr.bf16.gmra.mrb[0].mxu0 %v1199
        %v1827 = vpop.f32.mrb[0].mxu0
        %v1828 = vadd.f32 %v1306, %v1827
        %v1829 = vpop.f32.mrb[0].mxu0
        %v1830 = vadd.f32 %v1310, %v1829
        %v1831 = vpop.f32.mrb[0].mxu0
        %v1832 = vadd.f32 %v1306, %v1831
        %v1833 = vpop.f32.mrb[0].mxu0
        %v1834 = vadd.f32 %v1310, %v1833
        %1835 = vdwg.mxu0
        %1836 = vmatprep.subr.bf16.mxu0 %v1634
        %1837 = vmatpush1.bf16.msra.mxu0 %v1633
        %1838 = vmatprep.subr.bf16.mxu0 %v1636
        %1839 = vmatpush1.bf16.msra.mxu0 %v1635
        %1840 = vmatprep.subr.bf16.mxu0 %v1638
        %1841 = vmatpush1.bf16.msra.mxu0 %v1637
        %1842 = vmatprep.subr.bf16.mxu0 %v1640
        %1843 = vmatpush1.bf16.msra.mxu0 %v1639
        %1844 = vmatprep.subr.bf16.mxu0 %v1642
        %1845 = vmatpush1.bf16.msra.mxu0 %v1641
        %1846 = vmatprep.subr.bf16.mxu0 %v1644
        %1847 = vmatpush1.bf16.msra.mxu0 %v1643
        %1848 = vmatprep.subr.bf16.mxu0 %v1646
        %1849 = vmatpush1.bf16.msra.mxu0 %v1645
        %1850 = vmatprep.subr.bf16.mxu0 %v1648
        %1851 = vmatpush1.bf16.msra.mxu0 %v1647
        %1852 = vmatprep.subr.bf16.mxu0 %v1650
        %1853 = vmatpush1.bf16.msra.mxu0 %v1649
        %1854 = vmatprep.subr.bf16.mxu0 %v1652
        %1855 = vmatpush1.bf16.msra.mxu0 %v1651
        %1856 = vmatprep.subr.bf16.mxu0 %v1654
        %1857 = vmatpush1.bf16.msra.mxu0 %v1653
        %1858 = vmatprep.subr.bf16.mxu0 %v1656
        %1859 = vmatpush1.bf16.msra.mxu0 %v1655
        %1860 = vmatprep.subr.bf16.mxu0 %v1658
        %1861 = vmatpush1.bf16.msra.mxu0 %v1657
        %1862 = vmatprep.subr.bf16.mxu0 %v1660
        %1863 = vmatpush1.bf16.msra.mxu0 %v1659
        %1864 = vmatprep.subr.bf16.mxu0 %v1662
        %1865 = vmatpush1.bf16.msra.mxu0 %v1661
        %1866 = vmatprep.subr.bf16.mxu0 %v1664
        %1867 = vmatpush1.bf16.msra.mxu0 %v1663
        %1868 = vmatprep.mubr.bf16.mxu0 %v1202
        %1869 = vmatmul.mubr.bf16.gmra.mrb[0].mxu0 %v1201
        %v1870 = vpop.f32.mrb[0].mxu0
        %v1871 = vadd.f32 %v1828, %v1870
        %v1872 = vpop.f32.mrb[0].mxu0
        %v1873 = vadd.f32 %v1830, %v1872
        %v1874 = vpop.f32.mrb[0].mxu0
        %v1875 = vadd.f32 %v1832, %v1874
        %v1876 = vpop.f32.mrb[0].mxu0
        %v1877 = vadd.f32 %v1834, %v1876
        %1878 = vdwg.mxu0
        %1879 = vmatprep.subr.bf16.mxu0 %v1666
        %1880 = vmatpush1.bf16.msra.mxu0 %v1665
        %1881 = vmatprep.subr.bf16.mxu0 %v1668
        %1882 = vmatpush1.bf16.msra.mxu0 %v1667
        %1883 = vmatprep.subr.bf16.mxu0 %v1670
        %1884 = vmatpush1.bf16.msra.mxu0 %v1669
        %1885 = vmatprep.subr.bf16.mxu0 %v1672
        %1886 = vmatpush1.bf16.msra.mxu0 %v1671
        %1887 = vmatprep.subr.bf16.mxu0 %v1674
        %1888 = vmatpush1.bf16.msra.mxu0 %v1673
        %1889 = vmatprep.subr.bf16.mxu0 %v1676
        %1890 = vmatpush1.bf16.msra.mxu0 %v1675
        %1891 = vmatprep.subr.bf16.mxu0 %v1678
        %1892 = vmatpush1.bf16.msra.mxu0 %v1677
        %1893 = vmatprep.subr.bf16.mxu0 %v1680
        %1894 = vmatpush1.bf16.msra.mxu0 %v1679
        %1895 = vmatprep.subr.bf16.mxu0 %v1682
        %1896 = vmatpush1.bf16.msra.mxu0 %v1681
        %1897 = vmatprep.subr.bf16.mxu0 %v1684
        %1898 = vmatpush1.bf16.msra.mxu0 %v1683
        %1899 = vmatprep.subr.bf16.mxu0 %v1686
        %1900 = vmatpush1.bf16.msra.mxu0 %v1685
        %1901 = vmatprep.subr.bf16.mxu0 %v1688
        %1902 = vmatpush1.bf16.msra.mxu0 %v1687
        %1903 = vmatprep.subr.bf16.mxu0 %v1690
        %1904 = vmatpush1.bf16.msra.mxu0 %v1689
        %1905 = vmatprep.subr.bf16.mxu0 %v1692
        %1906 = vmatpush1.bf16.msra.mxu0 %v1691
        %1907 = vmatprep.subr.bf16.mxu0 %v1694
        %1908 = vmatpush1.bf16.msra.mxu0 %v1693
        %1909 = vmatprep.subr.bf16.mxu0 %v1696
        %1910 = vmatpush1.bf16.msra.mxu0 %v1695
        %1911 = vmatprep.mubr.bf16.mxu0 %v1204
        %1912 = vmatmul.mubr.bf16.gmra.mrb[0].mxu0 %v1203
        %v1913 = vpop.f32.mrb[0].mxu0
        %v1914 = vadd.f32 %v1871, %v1913
        %v1915 = vpop.f32.mrb[0].mxu0
        %v1916 = vadd.f32 %v1873, %v1915
        %v1917 = vpop.f32.mrb[0].mxu0
        %v1918 = vadd.f32 %v1875, %v1917
        %v1919 = vpop.f32.mrb[0].mxu0
        %v1920 = vadd.f32 %v1877, %v1919
        %1921 = vdwg.mxu0
        %v1922 = vadd.f32 %v1914, %v1918
        %v1923 = vrot.slane %v1922, 4
        %v1924 = vadd.f32 %v1922, %v1923
        %v1925 = vrot.slane %v1924, 2
        %v1926 = vadd.f32 %v1924, %v1925
        %v1927 = vrot.slane %v1926, 1
        %v1928 = vadd.f32 %v1926, %v1927
        %v1929 = vadd.f32 %v1916, %v1920
        %v1930 = vrot.slane %v1929, 4
        %v1931 = vadd.f32 %v1929, %v1930
        %v1932 = vrot.slane %v1931, 2
        %v1933 = vadd.f32 %v1931, %v1932
        %v1934 = vrot.slane %v1933, 1
        %v1935 = vadd.f32 %v1933, %v1934
        %v1936 = vrcp.pop 16.0
        %v1937 = vmul.f32 %v1928, %v1936
        %v1938 = vmul.f32 %v1935, %v1936
        %v1939 = vld [vmem:[%s5] sm:$0xff]
        %v1940 = vld [vmem:[%s5 + $0x8] sm:$0xff]
        %v1941 = vld [vmem:[%s5 + $0x10] sm:$0xff]
        %v1942 = vld [vmem:[%s5 + $0x18] sm:$0xff]
        %v1943 = vld [vmem:[%s5 + $0x20] sm:$0xff]
        %v1944 = vld [vmem:[%s5 + $0x28] sm:$0xff]
        %v1945 = vld [vmem:[%s5 + $0x30] sm:$0xff]
        %v1946 = vld [vmem:[%s5 + $0x38] sm:$0xff]
        %v1947 = vld [vmem:[%s5 + $0x40] sm:$0xff]
        %v1948 = vld [vmem:[%s5 + $0x48] sm:$0xff]
        %v1949 = vld [vmem:[%s5 + $0x50] sm:$0xff]
        %v1950 = vld [vmem:[%s5 + $0x58] sm:$0xff]
        %v1951 = vld [vmem:[%s5 + $0x60] sm:$0xff]
        %v1952 = vld [vmem:[%s5 + $0x68] sm:$0xff]
        %v1953 = vld [vmem:[%s5 + $0x70] sm:$0xff]
        %v1954 = vld [vmem:[%s5 + $0x78] sm:$0xff]
        %v1955 = vld [vmem:[%s5 + $0x80] sm:$0xff]
        %v1956 = vld [vmem:[%s5 + $0x88] sm:$0xff]
        %v1957 = vld [vmem:[%s5 + $0x90] sm:$0xff]
        %v1958 = vld [vmem:[%s5 + $0x98] sm:$0xff]
        %v1959 = vld [vmem:[%s5 + $0xa0] sm:$0xff]
        %v1960 = vld [vmem:[%s5 + $0xa8] sm:$0xff]
        %v1961 = vld [vmem:[%s5 + $0xb0] sm:$0xff]
        %v1962 = vld [vmem:[%s5 + $0xb8] sm:$0xff]
        %v1963 = vld [vmem:[%s5 + $0xc0] sm:$0xff]
        %v1964 = vld [vmem:[%s5 + $0xc8] sm:$0xff]
        %v1965 = vld [vmem:[%s5 + $0xd0] sm:$0xff]
        %v1966 = vld [vmem:[%s5 + $0xd8] sm:$0xff]
        %v1967 = vld [vmem:[%s5 + $0xe0] sm:$0xff]
        %v1968 = vld [vmem:[%s5 + $0xe8] sm:$0xff]
        %v1969 = vld [vmem:[%s5 + $0xf0] sm:$0xff]
        %v1970 = vld [vmem:[%s5 + $0xf8] sm:$0xff]
        %v1971 = vld [vmem:[%s6] sm:$0x1]
        %1972 = vmatprep.subr.mxu0 0.0
        %1973 = vmatpush1.msra.mxu0 %v1939
        %1974 = vmatprep.subr.mxu0 0.0
        %1975 = vmatpush1.msra.mxu0 %v1940
        %1976 = vmatprep.subr.mxu0 0.0
        %1977 = vmatpush1.msra.mxu0 %v1941
        %1978 = vmatprep.subr.mxu0 0.0
        %1979 = vmatpush1.msra.mxu0 %v1942
        %1980 = vmatprep.subr.mxu0 0.0
        %1981 = vmatpush1.msra.mxu0 %v1943
        %1982 = vmatprep.subr.mxu0 0.0
        %1983 = vmatpush1.msra.mxu0 %v1944
        %1984 = vmatprep.subr.mxu0 0.0
        %1985 = vmatpush1.msra.mxu0 %v1945
        %1986 = vmatprep.subr.mxu0 0.0
        %1987 = vmatpush1.msra.mxu0 %v1946
        %1988 = vmatprep.subr.mxu0 0.0
        %1989 = vmatpush1.msra.mxu0 %v1947
        %1990 = vmatprep.subr.mxu0 0.0
        %1991 = vmatpush1.msra.mxu0 %v1948
        %1992 = vmatprep.subr.mxu0 0.0
        %1993 = vmatpush1.msra.mxu0 %v1949
        %1994 = vmatprep.subr.mxu0 0.0
        %1995 = vmatpush1.msra.mxu0 %v1950
        %1996 = vmatprep.subr.mxu0 0.0
        %1997 = vmatpush1.msra.mxu0 %v1951
        %1998 = vmatprep.subr.mxu0 0.0
        %1999 = vmatpush1.msra.mxu0 %v1952
        %2000 = vmatprep.subr.mxu0 0.0
        %2001 = vmatpush1.msra.mxu0 %v1953
        %2002 = vmatprep.subr.mxu0 0.0
        %2003 = vmatpush1.msra.mxu0 %v1954
        %2004 = vmatprep.subr.mxu0 0.0
        %2005 = vmatpush1.msra.mxu0 %v1955
        %2006 = vmatprep.subr.mxu0 0.0
        %2007 = vmatpush1.msra.mxu0 %v1956
        %2008 = vmatprep.subr.mxu0 0.0
        %2009 = vmatpush1.msra.mxu0 %v1957
        %2010 = vmatprep.subr.mxu0 0.0
        %2011 = vmatpush1.msra.mxu0 %v1958
        %2012 = vmatprep.subr.mxu0 0.0
        %2013 = vmatpush1.msra.mxu0 %v1959
        %2014 = vmatprep.subr.mxu0 0.0
        %2015 = vmatpush1.msra.mxu0 %v1960
        %2016 = vmatprep.subr.mxu0 0.0
        %2017 = vmatpush1.msra.mxu0 %v1961
        %2018 = vmatprep.subr.mxu0 0.0
        %2019 = vmatpush1.msra.mxu0 %v1962
        %2020 = vmatprep.subr.mxu0 0.0
        %2021 = vmatpush1.msra.mxu0 %v1963
        %2022 = vmatprep.subr.mxu0 0.0
        %2023 = vmatpush1.msra.mxu0 %v1964
        %2024 = vmatprep.subr.mxu0 0.0
        %2025 = vmatpush1.msra.mxu0 %v1965
        %2026 = vmatprep.subr.mxu0 0.0
        %2027 = vmatpush1.msra.mxu0 %v1966
        %2028 = vmatprep.subr.mxu0 0.0
        %2029 = vmatpush1.msra.mxu0 %v1967
        %2030 = vmatprep.subr.mxu0 0.0
        %2031 = vmatpush1.msra.mxu0 %v1968
        %2032 = vmatprep.subr.mxu0 0.0
        %2033 = vmatpush1.msra.mxu0 %v1969
        %2034 = vmatprep.subr.mxu0 0.0
        %2035 = vmatpush1.msra.mxu0 %v1970
        %2036 = vmatprep.mubr.f32.mxu0 %v1938
        %2037 = vmatmul.mubr.f32.gmra.mrb[0].mxu0 %v1937
        %v2038 = vpop.f32.mrb[0].mxu0
        %v2039 = vadd.f32 %v1971, %v2038
        %v2040 = vpop.f32.mrb[0].mxu0
        %2041 = vdwg.mxu0
        %v2042 = vmax.f32 %v2039, 0.0
        %v2043 = vld [vmem:[%s7] sm:$0xff]
        %v2044 = vld [vmem:[%s8] sm:$0x3]
        %v2046 = vcombine.high %v2043, %v2043
        %v2048 = vlaneseq
        %v2049 = vshrl.u32 %v2048, 7
        %v2050 = vsub.s32 0, %v2049
        %v2051 = vrot.slane %v2044, %v2050
        %v2052 = vlaneseq
        %v2053 = vshrl.u32 %v2052, 7
        %v2054 = vsub.s32 1, %v2053
        %v2055 = vrot.slane %v2044, %v2054
        %vm2058 = vcmask 31744
        %v2060 = vsel %vm2058, %v2042, 0
        %vm2062 = vcmask 1043456
        %v2063 = vsel %vm2062, %v2043, 0
        %v2065 = vsel %vm2062, %v2046, 0
        %2067 = vmatprep.subr.mxu0 %v2065
        %2068 = vmatpush1.msra.mxu0 %v2063
        %2069 = vmatprep.subr.mxu0 0.0
        %2070 = vmatpush1.msra.mxu0 0.0
        %2071 = vmatprep.subr.mxu0 0.0
        %2072 = vmatpush1.msra.mxu0 0.0
        %2073 = vmatprep.subr.mxu0 0.0
        %2074 = vmatpush1.msra.mxu0 0.0
        %2075 = vmatprep.subr.mxu0 0.0
        %2076 = vmatpush1.msra.mxu0 0.0
        %2077 = vmatprep.subr.mxu0 0.0
        %2078 = vmatpush1.msra.mxu0 0.0
        %2079 = vmatprep.subr.mxu0 0.0
        %2080 = vmatpush1.msra.mxu0 0.0
        %2081 = vmatprep.subr.mxu0 0.0
        %2082 = vmatpush1.msra.mxu0 0.0
        %2083 = vmatprep.subr.mxu0 0.0
        %2084 = vmatpush1.msra.mxu0 0.0
        %2085 = vmatprep.subr.mxu0 0.0
        %2086 = vmatpush1.msra.mxu0 0.0
        %2087 = vmatprep.subr.mxu0 0.0
        %2088 = vmatpush1.msra.mxu0 0.0
        %2089 = vmatprep.subr.mxu0 0.0
        %2090 = vmatpush1.msra.mxu0 0.0
        %2091 = vmatprep.subr.mxu0 0.0
        %2092 = vmatpush1.msra.mxu0 0.0
        %2093 = vmatprep.subr.mxu0 0.0
        %2094 = vmatpush1.msra.mxu0 0.0
        %2095 = vmatprep.subr.mxu0 0.0
        %2096 = vmatpush1.msra.mxu0 0.0
        %2097 = vmatprep.subr.mxu0 0.0
        %2098 = vmatpush1.msra.mxu0 0.0
        %2099 = vmatprep.subr.mxu0 0.0
        %2100 = vmatpush1.msra.mxu0 0.0
        %2101 = vmatprep.subr.mxu0 0.0
        %2102 = vmatpush1.msra.mxu0 0.0
        %2103 = vmatprep.subr.mxu0 0.0
        %2104 = vmatpush1.msra.mxu0 0.0
        %2105 = vmatprep.subr.mxu0 0.0
        %2106 = vmatpush1.msra.mxu0 0.0
        %2107 = vmatprep.subr.mxu0 0.0
        %2108 = vmatpush1.msra.mxu0 0.0
        %2109 = vmatprep.subr.mxu0 0.0
        %2110 = vmatpush1.msra.mxu0 0.0
        %2111 = vmatprep.subr.mxu0 0.0
        %2112 = vmatpush1.msra.mxu0 0.0
        %2113 = vmatprep.subr.mxu0 0.0
        %2114 = vmatpush1.msra.mxu0 0.0
        %2115 = vmatprep.subr.mxu0 0.0
        %2116 = vmatpush1.msra.mxu0 0.0
        %2117 = vmatprep.subr.mxu0 0.0
        %2118 = vmatpush1.msra.mxu0 0.0
        %2119 = vmatprep.subr.mxu0 0.0
        %2120 = vmatpush1.msra.mxu0 0.0
        %2121 = vmatprep.subr.mxu0 0.0
        %2122 = vmatpush1.msra.mxu0 0.0
        %2123 = vmatprep.subr.mxu0 0.0
        %2124 = vmatpush1.msra.mxu0 0.0
        %2125 = vmatprep.subr.mxu0 0.0
        %2126 = vmatpush1.msra.mxu0 0.0
        %2127 = vmatprep.subr.mxu0 0.0
        %2128 = vmatpush1.msra.mxu0 0.0
        %2129 = vmatprep.subr.mxu0 0.0
        %2130 = vmatpush1.msra.mxu0 0.0
        %2131 = vmatprep.mubr.f32.mxu0 0.0
        %2132 = vmatmul.mubr.f32.gmra.mrb[0].mxu0 %v2060
        %v2133 = vpop.f32.mrb[0].mxu0
        %v2134 = vadd.f32 %v2051, %v2133
        %v2135 = vpop.f32.mrb[0].mxu0
        %v2136 = vadd.f32 %v2055, %v2135
        %2137 = vdwg.mxu0
        %v2138 = vxor.u32 %v2134, 2147483648
        %v2139 = vxor.u32 %v2136, 2147483648
        %v2140 = vmul.f32 %v2138, 1.442695
        %v2141 = vpow.pop %v2140
        %v2142 = vmul.f32 %v2139, 1.442695
        %v2143 = vpow.pop %v2142
        %v2144 = vadd.f32 %v2141, 1.0
        %v2145 = vadd.f32 %v2143, 1.0
        %v2146 = vrcp.pop %v2144
        %v2147 = vmul.f32 1.0, %v2146
        %v2148 = vrcp.pop %v2145
        %v2149 = vmul.f32 1.0, %v2148
        %v2150 = vlaneseq
        %v2151 = vshrl.u32 %v2150, 7
        %v2152 = vsub.s32 0, %v2151
        %v2153 = vrot.slane %v2147, %v2152
        %v2154 = vlaneseq
        %v2155 = vshrl.u32 %v2154, 7
        %v2156 = vsub.s32 0, %v2155
        %v2157 = vrot.slane %v2149, %v2156
        %v2158 = vmul.f32 %v1914, %v2153
        %v2159 = vmul.f32 %v1916, %v2157
        %v2160 = vmul.f32 %v1918, %v2153
        %v2161 = vmul.f32 %v1920, %v2157
        %v2162 = vadd.f32 %v2158, %v361
        %v2163 = vadd.f32 %v2159, %v362
        %v2164 = vadd.f32 %v2160, %v363
        %v2165 = vadd.f32 %v2161, %v364
        %2166 = vst [vmem:[%s355] sm:$0xff] %v2162
        %2167 = vst [vmem:[%s355 + $0x8] sm:$0xff] %v2163
        %2168 = vst [vmem:[%s355 + $0x10] sm:$0xff] %v2164
        %2169 = vst [vmem:[%s355 + $0x18] sm:$0xff] %v2165
        %s2170 = sand.u32 %s227, 1
        %s2171 = scalar_lea.sflag [#allocation4], %s2170
        %s2172 = sand.u32 %s227, 1
        %s2173 = smul.addr %s2172, 32
        %s2174 = scalar_lea.vmem [#allocation7], %s2173
        // Predicated region
        $region65: #{tpu_custom_call.1} parent=55 // pred_check
          %p2175 = pneg %p237
        $region66: #{tpu_custom_call.1} parent=55 // pred_check_branch
          %2177 = sbr.rel (%p2175) target = $region68
        $region67: #{tpu_custom_call.1} parent=55 // pred_region
          %s2179 = ssub.s32 512, 512
          %2180 = vsyncadd %s2171, %s2179
          %s2181 = smul.addr %s25, 4
          %s2182 = smul.addr %s2181, 128
          %s2183 = scalar_lea.hbm %s9, %s2182
          %s2184 = sshll.u32 %s2174, 4
          %s2185 = int_to_ptr.vmem [resolvable:$true] %s2184
          %2190 = dma.vmem_to_hbm [thread:$0]  %s2185, 512, %s2183, %s2171, 256, 256, 16
        $region68: #{tpu_custom_call.1} parent=55 // pred_fallthru
          _
      $region56: #{tpu_custom_call.1} parent=5 // pred_fallthru
        _
      %p2191 = scmp.le.s32.totalorder 2, %s20
      // Predicated region
      $region69: #{tpu_custom_call.1} parent=5 // pred_check
        %p2192 = pneg %p2191
      $region70: #{tpu_custom_call.1} parent=5 // pred_check_branch
        %2194 = sbr.rel (%p2192) target = $region72
      $region71: #{tpu_custom_call.1} parent=5 // pred_region
        %s2195 = ssub.s32 %s20, 2
        // Predicated region
        $region73: #{tpu_custom_call.1} parent=71 // pred_check
          %p2196 = pneg %p243
        $region74: #{tpu_custom_call.1} parent=71 // pred_check_branch
          %2198 = sbr.rel (%p2196) target = $region76
        $region75: #{tpu_custom_call.1} parent=71 // pred_region
          %s2199 = sand.u32 %s228, 1
          %s2200 = scalar_lea.sflag [#allocation4], %s2199
          %s2201 = sand.u32 %s228, 1
          %s2202 = smul.addr %s2201, 32
          %s2203 = scalar_lea.vmem [#allocation7], %s2202
          %2204 = dma.done %s2200, 512
        $region76: #{tpu_custom_call.1} parent=71 // pred_fallthru
          _
      $region72: #{tpu_custom_call.1} parent=5 // pred_fallthru
        _
    $region6: #{tpu_custom_call.1} parent=1 // loop_footer
      %s24 = sadd.s32 1, %s20
    $region7: #{tpu_custom_call.1} parent=1 // loop_footer_branch
      %19 = sbr.rel target = $region3
    $region8: #{tpu_custom_call.1} parent=1 // loop_exit
      _
    %2205 = vsyncpa [#allocation3], 1
    %s2206 = scalar_lea.sflag [#allocation3], 1
    %2207 = vsyncpa %s2206, 1
    %2208 = vsyncpa [#allocation6], 1
    %2209 = vsyncpa [#allocation4], 1
    %s2210 = scalar_lea.sflag [#allocation4], 1
    %2211 = vsyncpa %s2210, 1

</llo_original>
